<compile_context>
chip_gen: v5e
topology: v5e:2x2
jax: 0.10.0
libtpu: 0.0.40
codegen_flags: <defaults>
</compile_context>

<pallas_src>
import functools
import math

import jax
import jax.numpy as jnp
from jax.experimental import pallas as pl
from jax.experimental.pallas import tpu as pltpu


def _round_up(a, b):
    return ((a + b - 1) // b) * b


def _sublane_multiple(dtype):
    # sublane packing of the output dtype: f32 -> 8 rows/vreg, bf16 -> 16, 8-bit -> 32
    return {4: 8, 2: 16, 1: 32}.get(jnp.dtype(dtype).itemsize, 8)


def _vmem_capacity_bytes():
    try:
        return int(pltpu.get_tpu_info().vmem_capacity_bytes)
    except Exception:
        return 64 << 20  # conservative default (v7x per-TC VMEM)


def _rbf_kernel(x_ref, c_ref, o_ref, *, x_scale, flip_sign, exp_dtype):
    # x_ref: (tile_n, 1)   c_ref: (1, tile_c)   o_ref: (tile_n, tile_c)
    # gamma is folded into the data: centers arrive pre-scaled by sqrt(|gamma|)
    # and x is scaled here (O(tile_n) work instead of O(tile_n * tile_c)).
    x = x_ref[...] * x_scale                 # (tile_n, 1), f32
    d = x - c_ref[...]                       # broadcast -> (tile_n, tile_c)
    e = d * d
    if not flip_sign:                        # compile-time branch on sign(gamma)
        e = -e
    e = e.astype(exp_dtype)                  # bf16 exp path when bf16 output requested
    o_ref[...] = jnp.exp(e).astype(o_ref.dtype)


def rbf_forward(x, centers, gamma, *, max_tile_c=2048, out_dtype=jnp.float32):
    """x: any shape (flattened internally), centers: (C,) -> out: (N, C)."""
    x_flat = jnp.reshape(x, (-1, 1)).astype(jnp.float32)          # (N, 1)
    n = x_flat.shape[0]

    g = float(gamma)                          # Python scalar, as in the nn.Module
    scale = math.sqrt(abs(g))
    flip_sign = g < 0.0

    # Fold sqrt(|gamma|) into the centers once (O(C)); x is scaled inside the kernel.
    c_row = jnp.reshape(centers, (1, -1)).astype(jnp.float32) * jnp.float32(scale)
    n_centers = c_row.shape[1]

    # Center (lane) tile: multiple of 128, capped by max_tile_c.
    tile_c = min(_round_up(n_centers, 128), _round_up(max_tile_c, 128))

    # Pad the *input* centers so every block read is in bounds.  Pad with the
    # edge (last real, scaled) center so padded lanes never overflow exp() on
    # the gamma < 0 path; those lanes are masked on store (output is unpadded).
    c_pad = pl.cdiv(n_centers, tile_c) * tile_c
    if c_pad != n_centers:
        c_row = jnp.pad(c_row, ((0, 0), (0, c_pad - n_centers)), mode="edge")

    out_itemsize = jnp.dtype(out_dtype).itemsize
    sub = _sublane_multiple(out_dtype)

    # Generation-aware output-tile target: bigger tiles amortize the ~0.35us
    # per-grid-step overhead; keep double-buffered tiles inside scoped VMEM.
    vmem_cap = _vmem_capacity_bytes()
    max_out_tile_bytes = (16 << 20) if vmem_cap >= (100 << 20) else (8 << 20)

    rows_for_target = max(sub, (max_out_tile_bytes // (tile_c * out_itemsize)) // sub * sub)
    tile_n_eff = max(sub, min(rows_for_target, _round_up(n, sub)))

    grid = (pl.cdiv(n, tile_n_eff), pl.cdiv(n_centers, tile_c))

    out_tile_bytes = tile_n_eff * tile_c * out_itemsize
    vmem_limit = 2 * out_tile_bytes + 2 * (tile_n_eff * 4 + tile_c * 4) + (8 << 20)
    vmem_limit = int(min(max(vmem_limit, 32 << 20),
                         max(32 << 20, vmem_cap - (16 << 20))))

    # bf16 exp halves EUP pressure on v6e/v7x; only used when bf16 output requested
    # (compute path up to the square stays f32).  f32 output keeps f32 exp.
    exp_dtype = jnp.bfloat16 if jnp.dtype(out_dtype) == jnp.dtype(jnp.bfloat16) else jnp.float32

    kernel = functools.partial(_rbf_kernel, x_scale=float(scale),
                               flip_sign=flip_sign, exp_dtype=exp_dtype)

    out = pl.pallas_call(
        kernel,
        out_shape=jax.ShapeDtypeStruct((n, n_centers), out_dtype),
        grid_spec=pltpu.PrefetchScalarGridSpec(
            num_scalar_prefetch=0,
            grid=grid,
            in_specs=[
                pl.BlockSpec((tile_n_eff, 1), lambda i, j: (i, 0)),   # x rows
                pl.BlockSpec((1, tile_c), lambda i, j: (0, j)),       # scaled centers
            ],
            out_specs=pl.BlockSpec((tile_n_eff, tile_c), lambda i, j: (i, j)),
        ),
        compiler_params=pltpu.CompilerParams(
            dimension_semantics=("parallel", "parallel"),
            vmem_limit_bytes=vmem_limit,
        ),
    )(x_flat, c_row)
    return out


def rbf_reference(x, centers, gamma):
    x_flat = jnp.reshape(x, (-1, 1)).astype(jnp.float32)
    c_row = jnp.reshape(centers, (1, -1)).astype(jnp.float32)
    return jnp.exp(-gamma * jnp.square(x_flat - c_row))


if __name__ == "__main__":
    key = jax.random.PRNGKey(0)
    k1, k2 = jax.random.split(key)

    # Case 1: lane-aligned center count (the common case), gamma > 0.
    n_centers = 128
    centers = jnp.linspace(0.0, 10.0, n_centers, dtype=jnp.float32)
    gamma = 10.0
    x = jax.random.uniform(k1, (2, 4, 16, 16), minval=0.0, maxval=10.0,
                           dtype=jnp.float32)

    y = jax.block_until_ready(rbf_forward(x, centers, gamma))
    y_ref = rbf_reference(x, centers, gamma)
    assert y.shape == (2 * 4 * 16 * 16, n_centers), y.shape
    assert jnp.allclose(y, y_ref, atol=1e-5, rtol=1e-5)

    # Case 2: ragged center count (C % 128 != 0) and gamma < 0 -> exercises the
    # masked-store last tile and the edge-padded centers on the flip-sign path.
    n_centers2 = 200
    centers2 = jnp.linspace(-5.0, 5.0, n_centers2, dtype=jnp.float32)
    gamma2 = -0.25
    x2 = jax.random.uniform(k2, (2, 4, 16), minval=-5.0, maxval=5.0,
                            dtype=jnp.float32)

    y2 = jax.block_until_ready(rbf_forward(x2, centers2, gamma2))
    y2_ref = rbf_reference(x2, centers2, gamma2)
    assert y2.shape == (2 * 4 * 16, n_centers2), y2.shape
    assert jnp.allclose(y2, y2_ref, atol=1e-4, rtol=1e-5)
    assert bool(jnp.all(jnp.isfinite(y2)))

    print("KERNEL_OK")
</pallas_src>

<mosaic_0001>
module attributes {stable_mosaic.version = 11 : i64} {
  func.func @_rbf_kernel(%arg0: i32, %arg1: i32, %arg2: memref<2048x1xf32, #tpu.memory_space<vmem>>, %arg3: memref<1x128xf32, #tpu.memory_space<vmem>>, %arg4: memref<2048x128xf32, #tpu.memory_space<vmem>>) attributes {dimension_semantics = [#tpu.dimension_semantics<parallel>, #tpu.dimension_semantics<parallel>], iteration_bounds = array<i64: 1, 1>, scalar_prefetch = 0 : i64, scratch_operands = 0 : i64, tpu.core_type = #tpu.core_type<tc>, window_params = [{transform_indices = @transform_0, window_bounds = array<i64: 2048, 1>}, {transform_indices = @transform_1, window_bounds = array<i64: 1, 128>}, {transform_indices = @transform_2, window_bounds = array<i64: 2048, 128>}]} {
    %c0 = arith.constant 0 : index
    %c0_0 = arith.constant 0 : index
    %0 = vector.load %arg2[%c0, %c0_0] : memref<2048x1xf32, #tpu.memory_space<vmem>>, vector<2048x1xf32>
    %cst = arith.constant 3.1622777 : f32
    %1 = vector.broadcast %cst : f32 to vector<2048x1xf32>
    %2 = arith.mulf %0, %1 : vector<2048x1xf32>
    %c0_1 = arith.constant 0 : index
    %c0_2 = arith.constant 0 : index
    %3 = vector.load %arg3[%c0_1, %c0_2] : memref<1x128xf32, #tpu.memory_space<vmem>>, vector<1x128xf32>
    %4 = vector.broadcast %2 : vector<2048x1xf32> to vector<2048x128xf32>
    %5 = vector.broadcast %3 : vector<1x128xf32> to vector<2048x128xf32>
    %6 = arith.subf %4, %5 : vector<2048x128xf32>
    %7 = arith.mulf %6, %6 : vector<2048x128xf32>
    %cst_3 = arith.constant 0.000000e+00 : f32
    %8 = vector.broadcast %cst_3 : f32 to vector<2048x128xf32>
    %9 = arith.subf %8, %7 : vector<2048x128xf32>
    %10 = math.exp %9 : vector<2048x128xf32>
    %c0_4 = arith.constant 0 : index
    %c0_5 = arith.constant 0 : index
    %11 = vector.load %arg4[%c0_4, %c0_5] : memref<2048x128xf32, #tpu.memory_space<vmem>>, vector<2048x128xf32>
    tpu.vector_store %arg4[%c0_4, %c0_5], %10 {strides = array<i32>} : memref<2048x128xf32, #tpu.memory_space<vmem>>, vector<2048x128xf32>,
    return
  }
  func.func @transform_0(%arg0: i32, %arg1: i32) -> (i32, i32) {
    %c0_i32 = arith.constant 0 : i32
    %c0_i32_0 = arith.constant 0 : i32
    return %arg0, %c0_i32 : i32, i32
  }
  func.func @transform_1(%arg0: i32, %arg1: i32) -> (i32, i32) {
    %c0_i32 = arith.constant 0 : i32
    %c0_i32_0 = arith.constant 0 : i32
    return %c0_i32, %arg1 : i32, i32
  }
  func.func @transform_2(%arg0: i32, %arg1: i32) -> (i32, i32) {
    %c0_i32 = arith.constant 0 : i32
    return %arg0, %arg1 : i32, i32
  }
}

</mosaic_0001>

<llo_original>
// kernel: tpu_custom_call.1
$region0: #{tpu_custom_call.1}
  #allocation0 [shape = 'u32[]', space=smem, size = 0x4, offset = 0x4, fixed_abs, tag = 'smem constant byte address 0x4 - core index']
  #allocation1 [shape = 'u32[72,128]{1,0:T(1,128)}', space=vmem, size = 0x9000, scoped, tag = 'internal scratch']
  %s0 = inlined_call_operand.vmem [shape: f32[2048,1], index: 0, kind: input, shape index: {}]
  %s1 = inlined_call_operand.vmem [shape: f32[1,128], index: 1, kind: input, shape index: {}]
  %s2 = inlined_call_operand.hbm [shape: f32[2048,128], index: 2, kind: output, shape index: {}]
  %s3 = sld [smem:[#allocation0]]
  $region18: #{tpu_custom_call.1} parent=0
    _
  %s5 = ssub.s32 1, %s3
  %s6 = scalar_select 0, %s5, %s3
  $region1: #{tpu_custom_call.1} parent=0
    #allocation2 [shape = 'u8[1048576]{0}', space=vmem, size = 0x100000, scoped, tag = 'output window, operand 0, single buffered']
    #allocation3 [shape = 's32[1]{0}', space=sflag, size = 0x4, scoped, tag = 'scoped memory for tpu_custom_call.1']
    %7 = vsyncpa [#allocation3], 0
    // Predicated region
    $region2: #{tpu_custom_call.1} parent=1 // pred_check
      _
    $region3: #{tpu_custom_call.1} parent=1 // pred_check_branch
      %9 = sbr.rel (0) target = $region5
    $region4: #{tpu_custom_call.1} parent=1 // pred_region
      _
    $region5: #{tpu_custom_call.1} parent=1 // pred_fallthru
      _
    // Predicated region
    $region6: #{tpu_custom_call.1} parent=1 // pred_check
      _
    $region7: #{tpu_custom_call.1} parent=1 // pred_check_branch
      %11 = sbr.rel (0) target = $region9
    $region8: #{tpu_custom_call.1} parent=1 // pred_region
      _
    $region9: #{tpu_custom_call.1} parent=1 // pred_fallthru
      _
    %v12 = vld [vmem:[%s0] sm:$0xff]
    %v13 = vld [vmem:[%s0 + $0x8] sm:$0xff]
    %v14 = vld [vmem:[%s0 + $0x10] sm:$0xff]
    %v15 = vld [vmem:[%s0 + $0x18] sm:$0xff]
    %v16 = vld [vmem:[%s0 + $0x20] sm:$0xff]
    %v17 = vld [vmem:[%s0 + $0x28] sm:$0xff]
    %v18 = vld [vmem:[%s0 + $0x30] sm:$0xff]
    %v19 = vld [vmem:[%s0 + $0x38] sm:$0xff]
    %v20 = vld [vmem:[%s0 + $0x40] sm:$0xff]
    %v21 = vld [vmem:[%s0 + $0x48] sm:$0xff]
    %v22 = vld [vmem:[%s0 + $0x50] sm:$0xff]
    %v23 = vld [vmem:[%s0 + $0x58] sm:$0xff]
    %v24 = vld [vmem:[%s0 + $0x60] sm:$0xff]
    %v25 = vld [vmem:[%s0 + $0x68] sm:$0xff]
    %v26 = vld [vmem:[%s0 + $0x70] sm:$0xff]
    %v27 = vld [vmem:[%s0 + $0x78] sm:$0xff]
    %v28 = vld [vmem:[%s0 + $0x80] sm:$0xff]
    %v29 = vld [vmem:[%s0 + $0x88] sm:$0xff]
    %v30 = vld [vmem:[%s0 + $0x90] sm:$0xff]
    %v31 = vld [vmem:[%s0 + $0x98] sm:$0xff]
    %v32 = vld [vmem:[%s0 + $0xa0] sm:$0xff]
    %v33 = vld [vmem:[%s0 + $0xa8] sm:$0xff]
    %v34 = vld [vmem:[%s0 + $0xb0] sm:$0xff]
    %v35 = vld [vmem:[%s0 + $0xb8] sm:$0xff]
    %v36 = vld [vmem:[%s0 + $0xc0] sm:$0xff]
    %v37 = vld [vmem:[%s0 + $0xc8] sm:$0xff]
    %v38 = vld [vmem:[%s0 + $0xd0] sm:$0xff]
    %v39 = vld [vmem:[%s0 + $0xd8] sm:$0xff]
    %v40 = vld [vmem:[%s0 + $0xe0] sm:$0xff]
    %v41 = vld [vmem:[%s0 + $0xe8] sm:$0xff]
    %v42 = vld [vmem:[%s0 + $0xf0] sm:$0xff]
    %v43 = vld [vmem:[%s0 + $0xf8] sm:$0xff]
    %v44 = vld [vmem:[%s0 + $0x100] sm:$0xff]
    %v45 = vld [vmem:[%s0 + $0x108] sm:$0xff]
    %v46 = vld [vmem:[%s0 + $0x110] sm:$0xff]
    %v47 = vld [vmem:[%s0 + $0x118] sm:$0xff]
    %v48 = vld [vmem:[%s0 + $0x120] sm:$0xff]
    %v49 = vld [vmem:[%s0 + $0x128] sm:$0xff]
    %v50 = vld [vmem:[%s0 + $0x130] sm:$0xff]
    %v51 = vld [vmem:[%s0 + $0x138] sm:$0xff]
    %v52 = vld [vmem:[%s0 + $0x140] sm:$0xff]
    %v53 = vld [vmem:[%s0 + $0x148] sm:$0xff]
    %v54 = vld [vmem:[%s0 + $0x150] sm:$0xff]
    %v55 = vld [vmem:[%s0 + $0x158] sm:$0xff]
    %v56 = vld [vmem:[%s0 + $0x160] sm:$0xff]
    %v57 = vld [vmem:[%s0 + $0x168] sm:$0xff]
    %v58 = vld [vmem:[%s0 + $0x170] sm:$0xff]
    %v59 = vld [vmem:[%s0 + $0x178] sm:$0xff]
    %v60 = vld [vmem:[%s0 + $0x180] sm:$0xff]
    %v61 = vld [vmem:[%s0 + $0x188] sm:$0xff]
    %v62 = vld [vmem:[%s0 + $0x190] sm:$0xff]
    %v63 = vld [vmem:[%s0 + $0x198] sm:$0xff]
    %v64 = vld [vmem:[%s0 + $0x1a0] sm:$0xff]
    %v65 = vld [vmem:[%s0 + $0x1a8] sm:$0xff]
    %v66 = vld [vmem:[%s0 + $0x1b0] sm:$0xff]
    %v67 = vld [vmem:[%s0 + $0x1b8] sm:$0xff]
    %v68 = vld [vmem:[%s0 + $0x1c0] sm:$0xff]
    %v69 = vld [vmem:[%s0 + $0x1c8] sm:$0xff]
    %v70 = vld [vmem:[%s0 + $0x1d0] sm:$0xff]
    %v71 = vld [vmem:[%s0 + $0x1d8] sm:$0xff]
    %v72 = vld [vmem:[%s0 + $0x1e0] sm:$0xff]
    %v73 = vld [vmem:[%s0 + $0x1e8] sm:$0xff]
    %v74 = vld [vmem:[%s0 + $0x1f0] sm:$0xff]
    %v75 = vld [vmem:[%s0 + $0x1f8] sm:$0xff]
    %v76 = vld [vmem:[%s0 + $0x200] sm:$0xff]
    %v77 = vld [vmem:[%s0 + $0x208] sm:$0xff]
    %v78 = vld [vmem:[%s0 + $0x210] sm:$0xff]
    %v79 = vld [vmem:[%s0 + $0x218] sm:$0xff]
    %v80 = vld [vmem:[%s0 + $0x220] sm:$0xff]
    %v81 = vld [vmem:[%s0 + $0x228] sm:$0xff]
    %v82 = vld [vmem:[%s0 + $0x230] sm:$0xff]
    %v83 = vld [vmem:[%s0 + $0x238] sm:$0xff]
    %v84 = vld [vmem:[%s0 + $0x240] sm:$0xff]
    %v85 = vld [vmem:[%s0 + $0x248] sm:$0xff]
    %v86 = vld [vmem:[%s0 + $0x250] sm:$0xff]
    %v87 = vld [vmem:[%s0 + $0x258] sm:$0xff]
    %v88 = vld [vmem:[%s0 + $0x260] sm:$0xff]
    %v89 = vld [vmem:[%s0 + $0x268] sm:$0xff]
    %v90 = vld [vmem:[%s0 + $0x270] sm:$0xff]
    %v91 = vld [vmem:[%s0 + $0x278] sm:$0xff]
    %v92 = vld [vmem:[%s0 + $0x280] sm:$0xff]
    %v93 = vld [vmem:[%s0 + $0x288] sm:$0xff]
    %v94 = vld [vmem:[%s0 + $0x290] sm:$0xff]
    %v95 = vld [vmem:[%s0 + $0x298] sm:$0xff]
    %v96 = vld [vmem:[%s0 + $0x2a0] sm:$0xff]
    %v97 = vld [vmem:[%s0 + $0x2a8] sm:$0xff]
    %v98 = vld [vmem:[%s0 + $0x2b0] sm:$0xff]
    %v99 = vld [vmem:[%s0 + $0x2b8] sm:$0xff]
    %v100 = vld [vmem:[%s0 + $0x2c0] sm:$0xff]
    %v101 = vld [vmem:[%s0 + $0x2c8] sm:$0xff]
    %v102 = vld [vmem:[%s0 + $0x2d0] sm:$0xff]
    %v103 = vld [vmem:[%s0 + $0x2d8] sm:$0xff]
    %v104 = vld [vmem:[%s0 + $0x2e0] sm:$0xff]
    %v105 = vld [vmem:[%s0 + $0x2e8] sm:$0xff]
    %v106 = vld [vmem:[%s0 + $0x2f0] sm:$0xff]
    %v107 = vld [vmem:[%s0 + $0x2f8] sm:$0xff]
    %v108 = vld [vmem:[%s0 + $0x300] sm:$0xff]
    %v109 = vld [vmem:[%s0 + $0x308] sm:$0xff]
    %v110 = vld [vmem:[%s0 + $0x310] sm:$0xff]
    %v111 = vld [vmem:[%s0 + $0x318] sm:$0xff]
    %v112 = vld [vmem:[%s0 + $0x320] sm:$0xff]
    %v113 = vld [vmem:[%s0 + $0x328] sm:$0xff]
    %v114 = vld [vmem:[%s0 + $0x330] sm:$0xff]
    %v115 = vld [vmem:[%s0 + $0x338] sm:$0xff]
    %v116 = vld [vmem:[%s0 + $0x340] sm:$0xff]
    %v117 = vld [vmem:[%s0 + $0x348] sm:$0xff]
    %v118 = vld [vmem:[%s0 + $0x350] sm:$0xff]
    %v119 = vld [vmem:[%s0 + $0x358] sm:$0xff]
    %v120 = vld [vmem:[%s0 + $0x360] sm:$0xff]
    %v121 = vld [vmem:[%s0 + $0x368] sm:$0xff]
    %v122 = vld [vmem:[%s0 + $0x370] sm:$0xff]
    %v123 = vld [vmem:[%s0 + $0x378] sm:$0xff]
    %v124 = vld [vmem:[%s0 + $0x380] sm:$0xff]
    %v125 = vld [vmem:[%s0 + $0x388] sm:$0xff]
    %v126 = vld [vmem:[%s0 + $0x390] sm:$0xff]
    %v127 = vld [vmem:[%s0 + $0x398] sm:$0xff]
    %v128 = vld [vmem:[%s0 + $0x3a0] sm:$0xff]
    %v129 = vld [vmem:[%s0 + $0x3a8] sm:$0xff]
    %v130 = vld [vmem:[%s0 + $0x3b0] sm:$0xff]
    %v131 = vld [vmem:[%s0 + $0x3b8] sm:$0xff]
    %v132 = vld [vmem:[%s0 + $0x3c0] sm:$0xff]
    %v133 = vld [vmem:[%s0 + $0x3c8] sm:$0xff]
    %v134 = vld [vmem:[%s0 + $0x3d0] sm:$0xff]
    %v135 = vld [vmem:[%s0 + $0x3d8] sm:$0xff]
    %v136 = vld [vmem:[%s0 + $0x3e0] sm:$0xff]
    %v137 = vld [vmem:[%s0 + $0x3e8] sm:$0xff]
    %v138 = vld [vmem:[%s0 + $0x3f0] sm:$0xff]
    %v139 = vld [vmem:[%s0 + $0x3f8] sm:$0xff]
    %v140 = vld [vmem:[%s0 + $0x400] sm:$0xff]
    %v141 = vld [vmem:[%s0 + $0x408] sm:$0xff]
    %v142 = vld [vmem:[%s0 + $0x410] sm:$0xff]
    %v143 = vld [vmem:[%s0 + $0x418] sm:$0xff]
    %v144 = vld [vmem:[%s0 + $0x420] sm:$0xff]
    %v145 = vld [vmem:[%s0 + $0x428] sm:$0xff]
    %v146 = vld [vmem:[%s0 + $0x430] sm:$0xff]
    %v147 = vld [vmem:[%s0 + $0x438] sm:$0xff]
    %v148 = vld [vmem:[%s0 + $0x440] sm:$0xff]
    %v149 = vld [vmem:[%s0 + $0x448] sm:$0xff]
    %v150 = vld [vmem:[%s0 + $0x450] sm:$0xff]
    %v151 = vld [vmem:[%s0 + $0x458] sm:$0xff]
    %v152 = vld [vmem:[%s0 + $0x460] sm:$0xff]
    %v153 = vld [vmem:[%s0 + $0x468] sm:$0xff]
    %v154 = vld [vmem:[%s0 + $0x470] sm:$0xff]
    %v155 = vld [vmem:[%s0 + $0x478] sm:$0xff]
    %v156 = vld [vmem:[%s0 + $0x480] sm:$0xff]
    %v157 = vld [vmem:[%s0 + $0x488] sm:$0xff]
    %v158 = vld [vmem:[%s0 + $0x490] sm:$0xff]
    %v159 = vld [vmem:[%s0 + $0x498] sm:$0xff]
    %v160 = vld [vmem:[%s0 + $0x4a0] sm:$0xff]
    %v161 = vld [vmem:[%s0 + $0x4a8] sm:$0xff]
    %v162 = vld [vmem:[%s0 + $0x4b0] sm:$0xff]
    %v163 = vld [vmem:[%s0 + $0x4b8] sm:$0xff]
    %v164 = vld [vmem:[%s0 + $0x4c0] sm:$0xff]
    %v165 = vld [vmem:[%s0 + $0x4c8] sm:$0xff]
    %v166 = vld [vmem:[%s0 + $0x4d0] sm:$0xff]
    %v167 = vld [vmem:[%s0 + $0x4d8] sm:$0xff]
    %v168 = vld [vmem:[%s0 + $0x4e0] sm:$0xff]
    %v169 = vld [vmem:[%s0 + $0x4e8] sm:$0xff]
    %v170 = vld [vmem:[%s0 + $0x4f0] sm:$0xff]
    %v171 = vld [vmem:[%s0 + $0x4f8] sm:$0xff]
    %v172 = vld [vmem:[%s0 + $0x500] sm:$0xff]
    %v173 = vld [vmem:[%s0 + $0x508] sm:$0xff]
    %v174 = vld [vmem:[%s0 + $0x510] sm:$0xff]
    %v175 = vld [vmem:[%s0 + $0x518] sm:$0xff]
    %v176 = vld [vmem:[%s0 + $0x520] sm:$0xff]
    %v177 = vld [vmem:[%s0 + $0x528] sm:$0xff]
    %v178 = vld [vmem:[%s0 + $0x530] sm:$0xff]
    %v179 = vld [vmem:[%s0 + $0x538] sm:$0xff]
    %v180 = vld [vmem:[%s0 + $0x540] sm:$0xff]
    %v181 = vld [vmem:[%s0 + $0x548] sm:$0xff]
    %v182 = vld [vmem:[%s0 + $0x550] sm:$0xff]
    %v183 = vld [vmem:[%s0 + $0x558] sm:$0xff]
    %v184 = vld [vmem:[%s0 + $0x560] sm:$0xff]
    %v185 = vld [vmem:[%s0 + $0x568] sm:$0xff]
    %v186 = vld [vmem:[%s0 + $0x570] sm:$0xff]
    %v187 = vld [vmem:[%s0 + $0x578] sm:$0xff]
    %v188 = vld [vmem:[%s0 + $0x580] sm:$0xff]
    %v189 = vld [vmem:[%s0 + $0x588] sm:$0xff]
    %v190 = vld [vmem:[%s0 + $0x590] sm:$0xff]
    %v191 = vld [vmem:[%s0 + $0x598] sm:$0xff]
    %v192 = vld [vmem:[%s0 + $0x5a0] sm:$0xff]
    %v193 = vld [vmem:[%s0 + $0x5a8] sm:$0xff]
    %v194 = vld [vmem:[%s0 + $0x5b0] sm:$0xff]
    %v195 = vld [vmem:[%s0 + $0x5b8] sm:$0xff]
    %v196 = vld [vmem:[%s0 + $0x5c0] sm:$0xff]
    %v197 = vld [vmem:[%s0 + $0x5c8] sm:$0xff]
    %v198 = vld [vmem:[%s0 + $0x5d0] sm:$0xff]
    %v199 = vld [vmem:[%s0 + $0x5d8] sm:$0xff]
    %v200 = vld [vmem:[%s0 + $0x5e0] sm:$0xff]
    %v201 = vld [vmem:[%s0 + $0x5e8] sm:$0xff]
    %v202 = vld [vmem:[%s0 + $0x5f0] sm:$0xff]
    %v203 = vld [vmem:[%s0 + $0x5f8] sm:$0xff]
    %v204 = vld [vmem:[%s0 + $0x600] sm:$0xff]
    %v205 = vld [vmem:[%s0 + $0x608] sm:$0xff]
    %v206 = vld [vmem:[%s0 + $0x610] sm:$0xff]
    %v207 = vld [vmem:[%s0 + $0x618] sm:$0xff]
    %v208 = vld [vmem:[%s0 + $0x620] sm:$0xff]
    %v209 = vld [vmem:[%s0 + $0x628] sm:$0xff]
    %v210 = vld [vmem:[%s0 + $0x630] sm:$0xff]
    %v211 = vld [vmem:[%s0 + $0x638] sm:$0xff]
    %v212 = vld [vmem:[%s0 + $0x640] sm:$0xff]
    %v213 = vld [vmem:[%s0 + $0x648] sm:$0xff]
    %v214 = vld [vmem:[%s0 + $0x650] sm:$0xff]
    %v215 = vld [vmem:[%s0 + $0x658] sm:$0xff]
    %v216 = vld [vmem:[%s0 + $0x660] sm:$0xff]
    %v217 = vld [vmem:[%s0 + $0x668] sm:$0xff]
    %v218 = vld [vmem:[%s0 + $0x670] sm:$0xff]
    %v219 = vld [vmem:[%s0 + $0x678] sm:$0xff]
    %v220 = vld [vmem:[%s0 + $0x680] sm:$0xff]
    %v221 = vld [vmem:[%s0 + $0x688] sm:$0xff]
    %v222 = vld [vmem:[%s0 + $0x690] sm:$0xff]
    %v223 = vld [vmem:[%s0 + $0x698] sm:$0xff]
    %v224 = vld [vmem:[%s0 + $0x6a0] sm:$0xff]
    %v225 = vld [vmem:[%s0 + $0x6a8] sm:$0xff]
    %v226 = vld [vmem:[%s0 + $0x6b0] sm:$0xff]
    %v227 = vld [vmem:[%s0 + $0x6b8] sm:$0xff]
    %v228 = vld [vmem:[%s0 + $0x6c0] sm:$0xff]
    %v229 = vld [vmem:[%s0 + $0x6c8] sm:$0xff]
    %v230 = vld [vmem:[%s0 + $0x6d0] sm:$0xff]
    %v231 = vld [vmem:[%s0 + $0x6d8] sm:$0xff]
    %v232 = vld [vmem:[%s0 + $0x6e0] sm:$0xff]
    %v233 = vld [vmem:[%s0 + $0x6e8] sm:$0xff]
    %v234 = vld [vmem:[%s0 + $0x6f0] sm:$0xff]
    %v235 = vld [vmem:[%s0 + $0x6f8] sm:$0xff]
    %v236 = vld [vmem:[%s0 + $0x700] sm:$0xff]
    %v237 = vld [vmem:[%s0 + $0x708] sm:$0xff]
    %v238 = vld [vmem:[%s0 + $0x710] sm:$0xff]
    %v239 = vld [vmem:[%s0 + $0x718] sm:$0xff]
    %v240 = vld [vmem:[%s0 + $0x720] sm:$0xff]
    %v241 = vld [vmem:[%s0 + $0x728] sm:$0xff]
    %v242 = vld [vmem:[%s0 + $0x730] sm:$0xff]
    %v243 = vld [vmem:[%s0 + $0x738] sm:$0xff]
    %v244 = vld [vmem:[%s0 + $0x740] sm:$0xff]
    %v245 = vld [vmem:[%s0 + $0x748] sm:$0xff]
    %v246 = vld [vmem:[%s0 + $0x750] sm:$0xff]
    %v247 = vld [vmem:[%s0 + $0x758] sm:$0xff]
    %v248 = vld [vmem:[%s0 + $0x760] sm:$0xff]
    %v249 = vld [vmem:[%s0 + $0x768] sm:$0xff]
    %v250 = vld [vmem:[%s0 + $0x770] sm:$0xff]
    %v251 = vld [vmem:[%s0 + $0x778] sm:$0xff]
    %v252 = vld [vmem:[%s0 + $0x780] sm:$0xff]
    %v253 = vld [vmem:[%s0 + $0x788] sm:$0xff]
    %v254 = vld [vmem:[%s0 + $0x790] sm:$0xff]
    %v255 = vld [vmem:[%s0 + $0x798] sm:$0xff]
    %v256 = vld [vmem:[%s0 + $0x7a0] sm:$0xff]
    %v257 = vld [vmem:[%s0 + $0x7a8] sm:$0xff]
    %v258 = vld [vmem:[%s0 + $0x7b0] sm:$0xff]
    %v259 = vld [vmem:[%s0 + $0x7b8] sm:$0xff]
    %v260 = vld [vmem:[%s0 + $0x7c0] sm:$0xff]
    %v261 = vld [vmem:[%s0 + $0x7c8] sm:$0xff]
    %v262 = vld [vmem:[%s0 + $0x7d0] sm:$0xff]
    %v263 = vld [vmem:[%s0 + $0x7d8] sm:$0xff]
    %v264 = vld [vmem:[%s0 + $0x7e0] sm:$0xff]
    %v265 = vld [vmem:[%s0 + $0x7e8] sm:$0xff]
    %v266 = vld [vmem:[%s0 + $0x7f0] sm:$0xff]
    %v267 = vld [vmem:[%s0 + $0x7f8] sm:$0xff]
    %v268 = vmul.f32 %v12, 3.1622777
    %v269 = vmul.f32 %v13, 3.1622777
    %v270 = vmul.f32 %v14, 3.1622777
    %v271 = vmul.f32 %v15, 3.1622777
    %v272 = vmul.f32 %v16, 3.1622777
    %v273 = vmul.f32 %v17, 3.1622777
    %v274 = vmul.f32 %v18, 3.1622777
    %v275 = vmul.f32 %v19, 3.1622777
    %v276 = vmul.f32 %v20, 3.1622777
    %v277 = vmul.f32 %v21, 3.1622777
    %v278 = vmul.f32 %v22, 3.1622777
    %v279 = vmul.f32 %v23, 3.1622777
    %v280 = vmul.f32 %v24, 3.1622777
    %v281 = vmul.f32 %v25, 3.1622777
    %v282 = vmul.f32 %v26, 3.1622777
    %v283 = vmul.f32 %v27, 3.1622777
    %v284 = vmul.f32 %v28, 3.1622777
    %v285 = vmul.f32 %v29, 3.1622777
    %v286 = vmul.f32 %v30, 3.1622777
    %v287 = vmul.f32 %v31, 3.1622777
    %v288 = vmul.f32 %v32, 3.1622777
    %v289 = vmul.f32 %v33, 3.1622777
    %v290 = vmul.f32 %v34, 3.1622777
    %v291 = vmul.f32 %v35, 3.1622777
    %v292 = vmul.f32 %v36, 3.1622777
    %v293 = vmul.f32 %v37, 3.1622777
    %v294 = vmul.f32 %v38, 3.1622777
    %v295 = vmul.f32 %v39, 3.1622777
    %v296 = vmul.f32 %v40, 3.1622777
    %v297 = vmul.f32 %v41, 3.1622777
    %v298 = vmul.f32 %v42, 3.1622777
    %v299 = vmul.f32 %v43, 3.1622777
    %v300 = vmul.f32 %v44, 3.1622777
    %v301 = vmul.f32 %v45, 3.1622777
    %v302 = vmul.f32 %v46, 3.1622777
    %v303 = vmul.f32 %v47, 3.1622777
    %v304 = vmul.f32 %v48, 3.1622777
    %v305 = vmul.f32 %v49, 3.1622777
    %v306 = vmul.f32 %v50, 3.1622777
    %v307 = vmul.f32 %v51, 3.1622777
    %v308 = vmul.f32 %v52, 3.1622777
    %v309 = vmul.f32 %v53, 3.1622777
    %v310 = vmul.f32 %v54, 3.1622777
    %v311 = vmul.f32 %v55, 3.1622777
    %v312 = vmul.f32 %v56, 3.1622777
    %v313 = vmul.f32 %v57, 3.1622777
    %v314 = vmul.f32 %v58, 3.1622777
    %v315 = vmul.f32 %v59, 3.1622777
    %v316 = vmul.f32 %v60, 3.1622777
    %v317 = vmul.f32 %v61, 3.1622777
    %v318 = vmul.f32 %v62, 3.1622777
    %v319 = vmul.f32 %v63, 3.1622777
    %v320 = vmul.f32 %v64, 3.1622777
    %v321 = vmul.f32 %v65, 3.1622777
    %v322 = vmul.f32 %v66, 3.1622777
    %v323 = vmul.f32 %v67, 3.1622777
    %v324 = vmul.f32 %v68, 3.1622777
    %v325 = vmul.f32 %v69, 3.1622777
    %v326 = vmul.f32 %v70, 3.1622777
    %v327 = vmul.f32 %v71, 3.1622777
    %v328 = vmul.f32 %v72, 3.1622777
    %v329 = vmul.f32 %v73, 3.1622777
    %v330 = vmul.f32 %v74, 3.1622777
    %v331 = vmul.f32 %v75, 3.1622777
    %v332 = vmul.f32 %v76, 3.1622777
    %v333 = vmul.f32 %v77, 3.1622777
    %v334 = vmul.f32 %v78, 3.1622777
    %v335 = vmul.f32 %v79, 3.1622777
    %v336 = vmul.f32 %v80, 3.1622777
    %v337 = vmul.f32 %v81, 3.1622777
    %v338 = vmul.f32 %v82, 3.1622777
    %v339 = vmul.f32 %v83, 3.1622777
    %v340 = vmul.f32 %v84, 3.1622777
    %v341 = vmul.f32 %v85, 3.1622777
    %v342 = vmul.f32 %v86, 3.1622777
    %v343 = vmul.f32 %v87, 3.1622777
    %v344 = vmul.f32 %v88, 3.1622777
    %v345 = vmul.f32 %v89, 3.1622777
    %v346 = vmul.f32 %v90, 3.1622777
    %v347 = vmul.f32 %v91, 3.1622777
    %v348 = vmul.f32 %v92, 3.1622777
    %v349 = vmul.f32 %v93, 3.1622777
    %v350 = vmul.f32 %v94, 3.1622777
    %v351 = vmul.f32 %v95, 3.1622777
    %v352 = vmul.f32 %v96, 3.1622777
    %v353 = vmul.f32 %v97, 3.1622777
    %v354 = vmul.f32 %v98, 3.1622777
    %v355 = vmul.f32 %v99, 3.1622777
    %v356 = vmul.f32 %v100, 3.1622777
    %v357 = vmul.f32 %v101, 3.1622777
    %v358 = vmul.f32 %v102, 3.1622777
    %v359 = vmul.f32 %v103, 3.1622777
    %v360 = vmul.f32 %v104, 3.1622777
    %v361 = vmul.f32 %v105, 3.1622777
    %v362 = vmul.f32 %v106, 3.1622777
    %v363 = vmul.f32 %v107, 3.1622777
    %v364 = vmul.f32 %v108, 3.1622777
    %v365 = vmul.f32 %v109, 3.1622777
    %v366 = vmul.f32 %v110, 3.1622777
    %v367 = vmul.f32 %v111, 3.1622777
    %v368 = vmul.f32 %v112, 3.1622777
    %v369 = vmul.f32 %v113, 3.1622777
    %v370 = vmul.f32 %v114, 3.1622777
    %v371 = vmul.f32 %v115, 3.1622777
    %v372 = vmul.f32 %v116, 3.1622777
    %v373 = vmul.f32 %v117, 3.1622777
    %v374 = vmul.f32 %v118, 3.1622777
    %v375 = vmul.f32 %v119, 3.1622777
    %v376 = vmul.f32 %v120, 3.1622777
    %v377 = vmul.f32 %v121, 3.1622777
    %v378 = vmul.f32 %v122, 3.1622777
    %v379 = vmul.f32 %v123, 3.1622777
    %v380 = vmul.f32 %v124, 3.1622777
    %v381 = vmul.f32 %v125, 3.1622777
    %v382 = vmul.f32 %v126, 3.1622777
    %v383 = vmul.f32 %v127, 3.1622777
    %v384 = vmul.f32 %v128, 3.1622777
    %v385 = vmul.f32 %v129, 3.1622777
    %v386 = vmul.f32 %v130, 3.1622777
    %v387 = vmul.f32 %v131, 3.1622777
    %v388 = vmul.f32 %v132, 3.1622777
    %v389 = vmul.f32 %v133, 3.1622777
    %v390 = vmul.f32 %v134, 3.1622777
    %v391 = vmul.f32 %v135, 3.1622777
    %v392 = vmul.f32 %v136, 3.1622777
    %v393 = vmul.f32 %v137, 3.1622777
    %v394 = vmul.f32 %v138, 3.1622777
    %v395 = vmul.f32 %v139, 3.1622777
    %v396 = vmul.f32 %v140, 3.1622777
    %v397 = vmul.f32 %v141, 3.1622777
    %v398 = vmul.f32 %v142, 3.1622777
    %v399 = vmul.f32 %v143, 3.1622777
    %v400 = vmul.f32 %v144, 3.1622777
    %v401 = vmul.f32 %v145, 3.1622777
    %v402 = vmul.f32 %v146, 3.1622777
    %v403 = vmul.f32 %v147, 3.1622777
    %v404 = vmul.f32 %v148, 3.1622777
    %v405 = vmul.f32 %v149, 3.1622777
    %v406 = vmul.f32 %v150, 3.1622777
    %v407 = vmul.f32 %v151, 3.1622777
    %v408 = vmul.f32 %v152, 3.1622777
    %v409 = vmul.f32 %v153, 3.1622777
    %v410 = vmul.f32 %v154, 3.1622777
    %v411 = vmul.f32 %v155, 3.1622777
    %v412 = vmul.f32 %v156, 3.1622777
    %v413 = vmul.f32 %v157, 3.1622777
    %v414 = vmul.f32 %v158, 3.1622777
    %v415 = vmul.f32 %v159, 3.1622777
    %v416 = vmul.f32 %v160, 3.1622777
    %v417 = vmul.f32 %v161, 3.1622777
    %v418 = vmul.f32 %v162, 3.1622777
    %v419 = vmul.f32 %v163, 3.1622777
    %v420 = vmul.f32 %v164, 3.1622777
    %v421 = vmul.f32 %v165, 3.1622777
    %v422 = vmul.f32 %v166, 3.1622777
    %v423 = vmul.f32 %v167, 3.1622777
    %v424 = vmul.f32 %v168, 3.1622777
    %v425 = vmul.f32 %v169, 3.1622777
    %v426 = vmul.f32 %v170, 3.1622777
    %v427 = vmul.f32 %v171, 3.1622777
    %v428 = vmul.f32 %v172, 3.1622777
    %v429 = vmul.f32 %v173, 3.1622777
    %v430 = vmul.f32 %v174, 3.1622777
    %v431 = vmul.f32 %v175, 3.1622777
    %v432 = vmul.f32 %v176, 3.1622777
    %v433 = vmul.f32 %v177, 3.1622777
    %v434 = vmul.f32 %v178, 3.1622777
    %v435 = vmul.f32 %v179, 3.1622777
    %v436 = vmul.f32 %v180, 3.1622777
    %v437 = vmul.f32 %v181, 3.1622777
    %v438 = vmul.f32 %v182, 3.1622777
    %v439 = vmul.f32 %v183, 3.1622777
    %v440 = vmul.f32 %v184, 3.1622777
    %v441 = vmul.f32 %v185, 3.1622777
    %v442 = vmul.f32 %v186, 3.1622777
    %v443 = vmul.f32 %v187, 3.1622777
    %v444 = vmul.f32 %v188, 3.1622777
    %v445 = vmul.f32 %v189, 3.1622777
    %v446 = vmul.f32 %v190, 3.1622777
    %v447 = vmul.f32 %v191, 3.1622777
    %v448 = vmul.f32 %v192, 3.1622777
    %v449 = vmul.f32 %v193, 3.1622777
    %v450 = vmul.f32 %v194, 3.1622777
    %v451 = vmul.f32 %v195, 3.1622777
    %v452 = vmul.f32 %v196, 3.1622777
    %v453 = vmul.f32 %v197, 3.1622777
    %v454 = vmul.f32 %v198, 3.1622777
    %v455 = vmul.f32 %v199, 3.1622777
    %v456 = vmul.f32 %v200, 3.1622777
    %v457 = vmul.f32 %v201, 3.1622777
    %v458 = vmul.f32 %v202, 3.1622777
    %v459 = vmul.f32 %v203, 3.1622777
    %v460 = vmul.f32 %v204, 3.1622777
    %v461 = vmul.f32 %v205, 3.1622777
    %v462 = vmul.f32 %v206, 3.1622777
    %v463 = vmul.f32 %v207, 3.1622777
    %v464 = vmul.f32 %v208, 3.1622777
    %v465 = vmul.f32 %v209, 3.1622777
    %v466 = vmul.f32 %v210, 3.1622777
    %v467 = vmul.f32 %v211, 3.1622777
    %v468 = vmul.f32 %v212, 3.1622777
    %v469 = vmul.f32 %v213, 3.1622777
    %v470 = vmul.f32 %v214, 3.1622777
    %v471 = vmul.f32 %v215, 3.1622777
    %v472 = vmul.f32 %v216, 3.1622777
    %v473 = vmul.f32 %v217, 3.1622777
    %v474 = vmul.f32 %v218, 3.1622777
    %v475 = vmul.f32 %v219, 3.1622777
    %v476 = vmul.f32 %v220, 3.1622777
    %v477 = vmul.f32 %v221, 3.1622777
    %v478 = vmul.f32 %v222, 3.1622777
    %v479 = vmul.f32 %v223, 3.1622777
    %v480 = vmul.f32 %v224, 3.1622777
    %v481 = vmul.f32 %v225, 3.1622777
    %v482 = vmul.f32 %v226, 3.1622777
    %v483 = vmul.f32 %v227, 3.1622777
    %v484 = vmul.f32 %v228, 3.1622777
    %v485 = vmul.f32 %v229, 3.1622777
    %v486 = vmul.f32 %v230, 3.1622777
    %v487 = vmul.f32 %v231, 3.1622777
    %v488 = vmul.f32 %v232, 3.1622777
    %v489 = vmul.f32 %v233, 3.1622777
    %v490 = vmul.f32 %v234, 3.1622777
    %v491 = vmul.f32 %v235, 3.1622777
    %v492 = vmul.f32 %v236, 3.1622777
    %v493 = vmul.f32 %v237, 3.1622777
    %v494 = vmul.f32 %v238, 3.1622777
    %v495 = vmul.f32 %v239, 3.1622777
    %v496 = vmul.f32 %v240, 3.1622777
    %v497 = vmul.f32 %v241, 3.1622777
    %v498 = vmul.f32 %v242, 3.1622777
    %v499 = vmul.f32 %v243, 3.1622777
    %v500 = vmul.f32 %v244, 3.1622777
    %v501 = vmul.f32 %v245, 3.1622777
    %v502 = vmul.f32 %v246, 3.1622777
    %v503 = vmul.f32 %v247, 3.1622777
    %v504 = vmul.f32 %v248, 3.1622777
    %v505 = vmul.f32 %v249, 3.1622777
    %v506 = vmul.f32 %v250, 3.1622777
    %v507 = vmul.f32 %v251, 3.1622777
    %v508 = vmul.f32 %v252, 3.1622777
    %v509 = vmul.f32 %v253, 3.1622777
    %v510 = vmul.f32 %v254, 3.1622777
    %v511 = vmul.f32 %v255, 3.1622777
    %v512 = vmul.f32 %v256, 3.1622777
    %v513 = vmul.f32 %v257, 3.1622777
    %v514 = vmul.f32 %v258, 3.1622777
    %v515 = vmul.f32 %v259, 3.1622777
    %v516 = vmul.f32 %v260, 3.1622777
    %v517 = vmul.f32 %v261, 3.1622777
    %v518 = vmul.f32 %v262, 3.1622777
    %v519 = vmul.f32 %v263, 3.1622777
    %v520 = vmul.f32 %v264, 3.1622777
    %v521 = vmul.f32 %v265, 3.1622777
    %v522 = vmul.f32 %v266, 3.1622777
    %v523 = vmul.f32 %v267, 3.1622777
    %v524 = vld [vmem:[%s1] sm:$0x1]
    %526 = vset.pattern.permute.xlu0 0
    %527 = vperm.xlu0 %526, %v268
    %v528 = vpop.permute.xlu0 %527
    %531 = vset.pattern.permute.xlu0 0
    %532 = vperm.xlu0 %531, %v269
    %v533 = vpop.permute.xlu0 %532
    %536 = vset.pattern.permute.xlu0 0
    %537 = vperm.xlu0 %536, %v270
    %v538 = vpop.permute.xlu0 %537
    %541 = vset.pattern.permute.xlu0 0
    %542 = vperm.xlu0 %541, %v271
    %v543 = vpop.permute.xlu0 %542
    %546 = vset.pattern.permute.xlu0 0
    %547 = vperm.xlu0 %546, %v272
    %v548 = vpop.permute.xlu0 %547
    %551 = vset.pattern.permute.xlu0 0
    %552 = vperm.xlu0 %551, %v273
    %v553 = vpop.permute.xlu0 %552
    %556 = vset.pattern.permute.xlu0 0
    %557 = vperm.xlu0 %556, %v274
    %v558 = vpop.permute.xlu0 %557
    %561 = vset.pattern.permute.xlu0 0
    %562 = vperm.xlu0 %561, %v275
    %v563 = vpop.permute.xlu0 %562
    %566 = vset.pattern.permute.xlu0 0
    %567 = vperm.xlu0 %566, %v276
    %v568 = vpop.permute.xlu0 %567
    %571 = vset.pattern.permute.xlu0 0
    %572 = vperm.xlu0 %571, %v277
    %v573 = vpop.permute.xlu0 %572
    %576 = vset.pattern.permute.xlu0 0
    %577 = vperm.xlu0 %576, %v278
    %v578 = vpop.permute.xlu0 %577
    %581 = vset.pattern.permute.xlu0 0
    %582 = vperm.xlu0 %581, %v279
    %v583 = vpop.permute.xlu0 %582
    %586 = vset.pattern.permute.xlu0 0
    %587 = vperm.xlu0 %586, %v280
    %v588 = vpop.permute.xlu0 %587
    %591 = vset.pattern.permute.xlu0 0
    %592 = vperm.xlu0 %591, %v281
    %v593 = vpop.permute.xlu0 %592
    %596 = vset.pattern.permute.xlu0 0
    %597 = vperm.xlu0 %596, %v282
    %v598 = vpop.permute.xlu0 %597
    %601 = vset.pattern.permute.xlu0 0
    %602 = vperm.xlu0 %601, %v283
    %v603 = vpop.permute.xlu0 %602
    %606 = vset.pattern.permute.xlu0 0
    %607 = vperm.xlu0 %606, %v284
    %v608 = vpop.permute.xlu0 %607
    %611 = vset.pattern.permute.xlu0 0
    %612 = vperm.xlu0 %611, %v285
    %v613 = vpop.permute.xlu0 %612
    %616 = vset.pattern.permute.xlu0 0
    %617 = vperm.xlu0 %616, %v286
    %v618 = vpop.permute.xlu0 %617
    %621 = vset.pattern.permute.xlu0 0
    %622 = vperm.xlu0 %621, %v287
    %v623 = vpop.permute.xlu0 %622
    %626 = vset.pattern.permute.xlu0 0
    %627 = vperm.xlu0 %626, %v288
    %v628 = vpop.permute.xlu0 %627
    %631 = vset.pattern.permute.xlu0 0
    %632 = vperm.xlu0 %631, %v289
    %v633 = vpop.permute.xlu0 %632
    %636 = vset.pattern.permute.xlu0 0
    %637 = vperm.xlu0 %636, %v290
    %v638 = vpop.permute.xlu0 %637
    %641 = vset.pattern.permute.xlu0 0
    %642 = vperm.xlu0 %641, %v291
    %v643 = vpop.permute.xlu0 %642
    %646 = vset.pattern.permute.xlu0 0
    %647 = vperm.xlu0 %646, %v292
    %v648 = vpop.permute.xlu0 %647
    %651 = vset.pattern.permute.xlu0 0
    %652 = vperm.xlu0 %651, %v293
    %v653 = vpop.permute.xlu0 %652
    %656 = vset.pattern.permute.xlu0 0
    %657 = vperm.xlu0 %656, %v294
    %v658 = vpop.permute.xlu0 %657
    %661 = vset.pattern.permute.xlu0 0
    %662 = vperm.xlu0 %661, %v295
    %v663 = vpop.permute.xlu0 %662
    %666 = vset.pattern.permute.xlu0 0
    %667 = vperm.xlu0 %666, %v296
    %v668 = vpop.permute.xlu0 %667
    %671 = vset.pattern.permute.xlu0 0
    %672 = vperm.xlu0 %671, %v297
    %v673 = vpop.permute.xlu0 %672
    %676 = vset.pattern.permute.xlu0 0
    %677 = vperm.xlu0 %676, %v298
    %v678 = vpop.permute.xlu0 %677
    %681 = vset.pattern.permute.xlu0 0
    %682 = vperm.xlu0 %681, %v299
    %v683 = vpop.permute.xlu0 %682
    %686 = vset.pattern.permute.xlu0 0
    %687 = vperm.xlu0 %686, %v300
    %v688 = vpop.permute.xlu0 %687
    %691 = vset.pattern.permute.xlu0 0
    %692 = vperm.xlu0 %691, %v301
    %v693 = vpop.permute.xlu0 %692
    %696 = vset.pattern.permute.xlu0 0
    %697 = vperm.xlu0 %696, %v302
    %v698 = vpop.permute.xlu0 %697
    %701 = vset.pattern.permute.xlu0 0
    %702 = vperm.xlu0 %701, %v303
    %v703 = vpop.permute.xlu0 %702
    %706 = vset.pattern.permute.xlu0 0
    %707 = vperm.xlu0 %706, %v304
    %v708 = vpop.permute.xlu0 %707
    %711 = vset.pattern.permute.xlu0 0
    %712 = vperm.xlu0 %711, %v305
    %v713 = vpop.permute.xlu0 %712
    %716 = vset.pattern.permute.xlu0 0
    %717 = vperm.xlu0 %716, %v306
    %v718 = vpop.permute.xlu0 %717
    %721 = vset.pattern.permute.xlu0 0
    %722 = vperm.xlu0 %721, %v307
    %v723 = vpop.permute.xlu0 %722
    %726 = vset.pattern.permute.xlu0 0
    %727 = vperm.xlu0 %726, %v308
    %v728 = vpop.permute.xlu0 %727
    %731 = vset.pattern.permute.xlu0 0
    %732 = vperm.xlu0 %731, %v309
    %v733 = vpop.permute.xlu0 %732
    %736 = vset.pattern.permute.xlu0 0
    %737 = vperm.xlu0 %736, %v310
    %v738 = vpop.permute.xlu0 %737
    %741 = vset.pattern.permute.xlu0 0
    %742 = vperm.xlu0 %741, %v311
    %v743 = vpop.permute.xlu0 %742
    %746 = vset.pattern.permute.xlu0 0
    %747 = vperm.xlu0 %746, %v312
    %v748 = vpop.permute.xlu0 %747
    %751 = vset.pattern.permute.xlu0 0
    %752 = vperm.xlu0 %751, %v313
    %v753 = vpop.permute.xlu0 %752
    %756 = vset.pattern.permute.xlu0 0
    %757 = vperm.xlu0 %756, %v314
    %v758 = vpop.permute.xlu0 %757
    %761 = vset.pattern.permute.xlu0 0
    %762 = vperm.xlu0 %761, %v315
    %v763 = vpop.permute.xlu0 %762
    %766 = vset.pattern.permute.xlu0 0
    %767 = vperm.xlu0 %766, %v316
    %v768 = vpop.permute.xlu0 %767
    %771 = vset.pattern.permute.xlu0 0
    %772 = vperm.xlu0 %771, %v317
    %v773 = vpop.permute.xlu0 %772
    %776 = vset.pattern.permute.xlu0 0
    %777 = vperm.xlu0 %776, %v318
    %v778 = vpop.permute.xlu0 %777
    %781 = vset.pattern.permute.xlu0 0
    %782 = vperm.xlu0 %781, %v319
    %v783 = vpop.permute.xlu0 %782
    %786 = vset.pattern.permute.xlu0 0
    %787 = vperm.xlu0 %786, %v320
    %v788 = vpop.permute.xlu0 %787
    %791 = vset.pattern.permute.xlu0 0
    %792 = vperm.xlu0 %791, %v321
    %v793 = vpop.permute.xlu0 %792
    %796 = vset.pattern.permute.xlu0 0
    %797 = vperm.xlu0 %796, %v322
    %v798 = vpop.permute.xlu0 %797
    %801 = vset.pattern.permute.xlu0 0
    %802 = vperm.xlu0 %801, %v323
    %v803 = vpop.permute.xlu0 %802
    %806 = vset.pattern.permute.xlu0 0
    %807 = vperm.xlu0 %806, %v324
    %v808 = vpop.permute.xlu0 %807
    %811 = vset.pattern.permute.xlu0 0
    %812 = vperm.xlu0 %811, %v325
    %v813 = vpop.permute.xlu0 %812
    %816 = vset.pattern.permute.xlu0 0
    %817 = vperm.xlu0 %816, %v326
    %v818 = vpop.permute.xlu0 %817
    %821 = vset.pattern.permute.xlu0 0
    %822 = vperm.xlu0 %821, %v327
    %v823 = vpop.permute.xlu0 %822
    %826 = vset.pattern.permute.xlu0 0
    %827 = vperm.xlu0 %826, %v328
    %v828 = vpop.permute.xlu0 %827
    %831 = vset.pattern.permute.xlu0 0
    %832 = vperm.xlu0 %831, %v329
    %v833 = vpop.permute.xlu0 %832
    %836 = vset.pattern.permute.xlu0 0
    %837 = vperm.xlu0 %836, %v330
    %v838 = vpop.permute.xlu0 %837
    %841 = vset.pattern.permute.xlu0 0
    %842 = vperm.xlu0 %841, %v331
    %v843 = vpop.permute.xlu0 %842
    %846 = vset.pattern.permute.xlu0 0
    %847 = vperm.xlu0 %846, %v332
    %v848 = vpop.permute.xlu0 %847
    %851 = vset.pattern.permute.xlu0 0
    %852 = vperm.xlu0 %851, %v333
    %v853 = vpop.permute.xlu0 %852
    %856 = vset.pattern.permute.xlu0 0
    %857 = vperm.xlu0 %856, %v334
    %v858 = vpop.permute.xlu0 %857
    %861 = vset.pattern.permute.xlu0 0
    %862 = vperm.xlu0 %861, %v335
    %v863 = vpop.permute.xlu0 %862
    %866 = vset.pattern.permute.xlu0 0
    %867 = vperm.xlu0 %866, %v336
    %v868 = vpop.permute.xlu0 %867
    %871 = vset.pattern.permute.xlu0 0
    %872 = vperm.xlu0 %871, %v337
    %v873 = vpop.permute.xlu0 %872
    %876 = vset.pattern.permute.xlu0 0
    %877 = vperm.xlu0 %876, %v338
    %v878 = vpop.permute.xlu0 %877
    %881 = vset.pattern.permute.xlu0 0
    %882 = vperm.xlu0 %881, %v339
    %v883 = vpop.permute.xlu0 %882
    %886 = vset.pattern.permute.xlu0 0
    %887 = vperm.xlu0 %886, %v340
    %v888 = vpop.permute.xlu0 %887
    %891 = vset.pattern.permute.xlu0 0
    %892 = vperm.xlu0 %891, %v341
    %v893 = vpop.permute.xlu0 %892
    %896 = vset.pattern.permute.xlu0 0
    %897 = vperm.xlu0 %896, %v342
    %v898 = vpop.permute.xlu0 %897
    %901 = vset.pattern.permute.xlu0 0
    %902 = vperm.xlu0 %901, %v343
    %v903 = vpop.permute.xlu0 %902
    %906 = vset.pattern.permute.xlu0 0
    %907 = vperm.xlu0 %906, %v344
    %v908 = vpop.permute.xlu0 %907
    %911 = vset.pattern.permute.xlu0 0
    %912 = vperm.xlu0 %911, %v345
    %v913 = vpop.permute.xlu0 %912
    %916 = vset.pattern.permute.xlu0 0
    %917 = vperm.xlu0 %916, %v346
    %v918 = vpop.permute.xlu0 %917
    %921 = vset.pattern.permute.xlu0 0
    %922 = vperm.xlu0 %921, %v347
    %v923 = vpop.permute.xlu0 %922
    %926 = vset.pattern.permute.xlu0 0
    %927 = vperm.xlu0 %926, %v348
    %v928 = vpop.permute.xlu0 %927
    %931 = vset.pattern.permute.xlu0 0
    %932 = vperm.xlu0 %931, %v349
    %v933 = vpop.permute.xlu0 %932
    %936 = vset.pattern.permute.xlu0 0
    %937 = vperm.xlu0 %936, %v350
    %v938 = vpop.permute.xlu0 %937
    %941 = vset.pattern.permute.xlu0 0
    %942 = vperm.xlu0 %941, %v351
    %v943 = vpop.permute.xlu0 %942
    %946 = vset.pattern.permute.xlu0 0
    %947 = vperm.xlu0 %946, %v352
    %v948 = vpop.permute.xlu0 %947
    %951 = vset.pattern.permute.xlu0 0
    %952 = vperm.xlu0 %951, %v353
    %v953 = vpop.permute.xlu0 %952
    %956 = vset.pattern.permute.xlu0 0
    %957 = vperm.xlu0 %956, %v354
    %v958 = vpop.permute.xlu0 %957
    %961 = vset.pattern.permute.xlu0 0
    %962 = vperm.xlu0 %961, %v355
    %v963 = vpop.permute.xlu0 %962
    %966 = vset.pattern.permute.xlu0 0
    %967 = vperm.xlu0 %966, %v356
    %v968 = vpop.permute.xlu0 %967
    %971 = vset.pattern.permute.xlu0 0
    %972 = vperm.xlu0 %971, %v357
    %v973 = vpop.permute.xlu0 %972
    %976 = vset.pattern.permute.xlu0 0
    %977 = vperm.xlu0 %976, %v358
    %v978 = vpop.permute.xlu0 %977
    %981 = vset.pattern.permute.xlu0 0
    %982 = vperm.xlu0 %981, %v359
    %v983 = vpop.permute.xlu0 %982
    %986 = vset.pattern.permute.xlu0 0
    %987 = vperm.xlu0 %986, %v360
    %v988 = vpop.permute.xlu0 %987
    %991 = vset.pattern.permute.xlu0 0
    %992 = vperm.xlu0 %991, %v361
    %v993 = vpop.permute.xlu0 %992
    %996 = vset.pattern.permute.xlu0 0
    %997 = vperm.xlu0 %996, %v362
    %v998 = vpop.permute.xlu0 %997
    %1001 = vset.pattern.permute.xlu0 0
    %1002 = vperm.xlu0 %1001, %v363
    %v1003 = vpop.permute.xlu0 %1002
    %1006 = vset.pattern.permute.xlu0 0
    %1007 = vperm.xlu0 %1006, %v364
    %v1008 = vpop.permute.xlu0 %1007
    %1011 = vset.pattern.permute.xlu0 0
    %1012 = vperm.xlu0 %1011, %v365
    %v1013 = vpop.permute.xlu0 %1012
    %1016 = vset.pattern.permute.xlu0 0
    %1017 = vperm.xlu0 %1016, %v366
    %v1018 = vpop.permute.xlu0 %1017
    %1021 = vset.pattern.permute.xlu0 0
    %1022 = vperm.xlu0 %1021, %v367
    %v1023 = vpop.permute.xlu0 %1022
    %1026 = vset.pattern.permute.xlu0 0
    %1027 = vperm.xlu0 %1026, %v368
    %v1028 = vpop.permute.xlu0 %1027
    %1031 = vset.pattern.permute.xlu0 0
    %1032 = vperm.xlu0 %1031, %v369
    %v1033 = vpop.permute.xlu0 %1032
    %1036 = vset.pattern.permute.xlu0 0
    %1037 = vperm.xlu0 %1036, %v370
    %v1038 = vpop.permute.xlu0 %1037
    %1041 = vset.pattern.permute.xlu0 0
    %1042 = vperm.xlu0 %1041, %v371
    %v1043 = vpop.permute.xlu0 %1042
    %1046 = vset.pattern.permute.xlu0 0
    %1047 = vperm.xlu0 %1046, %v372
    %v1048 = vpop.permute.xlu0 %1047
    %1051 = vset.pattern.permute.xlu0 0
    %1052 = vperm.xlu0 %1051, %v373
    %v1053 = vpop.permute.xlu0 %1052
    %1056 = vset.pattern.permute.xlu0 0
    %1057 = vperm.xlu0 %1056, %v374
    %v1058 = vpop.permute.xlu0 %1057
    %1061 = vset.pattern.permute.xlu0 0
    %1062 = vperm.xlu0 %1061, %v375
    %v1063 = vpop.permute.xlu0 %1062
    %1066 = vset.pattern.permute.xlu0 0
    %1067 = vperm.xlu0 %1066, %v376
    %v1068 = vpop.permute.xlu0 %1067
    %1071 = vset.pattern.permute.xlu0 0
    %1072 = vperm.xlu0 %1071, %v377
    %v1073 = vpop.permute.xlu0 %1072
    %1076 = vset.pattern.permute.xlu0 0
    %1077 = vperm.xlu0 %1076, %v378
    %v1078 = vpop.permute.xlu0 %1077
    %1081 = vset.pattern.permute.xlu0 0
    %1082 = vperm.xlu0 %1081, %v379
    %v1083 = vpop.permute.xlu0 %1082
    %1086 = vset.pattern.permute.xlu0 0
    %1087 = vperm.xlu0 %1086, %v380
    %v1088 = vpop.permute.xlu0 %1087
    %1091 = vset.pattern.permute.xlu0 0
    %1092 = vperm.xlu0 %1091, %v381
    %v1093 = vpop.permute.xlu0 %1092
    %1096 = vset.pattern.permute.xlu0 0
    %1097 = vperm.xlu0 %1096, %v382
    %v1098 = vpop.permute.xlu0 %1097
    %1101 = vset.pattern.permute.xlu0 0
    %1102 = vperm.xlu0 %1101, %v383
    %v1103 = vpop.permute.xlu0 %1102
    %1106 = vset.pattern.permute.xlu0 0
    %1107 = vperm.xlu0 %1106, %v384
    %v1108 = vpop.permute.xlu0 %1107
    %1111 = vset.pattern.permute.xlu0 0
    %1112 = vperm.xlu0 %1111, %v385
    %v1113 = vpop.permute.xlu0 %1112
    %1116 = vset.pattern.permute.xlu0 0
    %1117 = vperm.xlu0 %1116, %v386
    %v1118 = vpop.permute.xlu0 %1117
    %1121 = vset.pattern.permute.xlu0 0
    %1122 = vperm.xlu0 %1121, %v387
    %v1123 = vpop.permute.xlu0 %1122
    %1126 = vset.pattern.permute.xlu0 0
    %1127 = vperm.xlu0 %1126, %v388
    %v1128 = vpop.permute.xlu0 %1127
    %1131 = vset.pattern.permute.xlu0 0
    %1132 = vperm.xlu0 %1131, %v389
    %v1133 = vpop.permute.xlu0 %1132
    %1136 = vset.pattern.permute.xlu0 0
    %1137 = vperm.xlu0 %1136, %v390
    %v1138 = vpop.permute.xlu0 %1137
    %1141 = vset.pattern.permute.xlu0 0
    %1142 = vperm.xlu0 %1141, %v391
    %v1143 = vpop.permute.xlu0 %1142
    %1146 = vset.pattern.permute.xlu0 0
    %1147 = vperm.xlu0 %1146, %v392
    %v1148 = vpop.permute.xlu0 %1147
    %1151 = vset.pattern.permute.xlu0 0
    %1152 = vperm.xlu0 %1151, %v393
    %v1153 = vpop.permute.xlu0 %1152
    %1156 = vset.pattern.permute.xlu0 0
    %1157 = vperm.xlu0 %1156, %v394
    %v1158 = vpop.permute.xlu0 %1157
    %1161 = vset.pattern.permute.xlu0 0
    %1162 = vperm.xlu0 %1161, %v395
    %v1163 = vpop.permute.xlu0 %1162
    %1166 = vset.pattern.permute.xlu0 0
    %1167 = vperm.xlu0 %1166, %v396
    %v1168 = vpop.permute.xlu0 %1167
    %1171 = vset.pattern.permute.xlu0 0
    %1172 = vperm.xlu0 %1171, %v397
    %v1173 = vpop.permute.xlu0 %1172
    %1176 = vset.pattern.permute.xlu0 0
    %1177 = vperm.xlu0 %1176, %v398
    %v1178 = vpop.permute.xlu0 %1177
    %1181 = vset.pattern.permute.xlu0 0
    %1182 = vperm.xlu0 %1181, %v399
    %v1183 = vpop.permute.xlu0 %1182
    %1186 = vset.pattern.permute.xlu0 0
    %1187 = vperm.xlu0 %1186, %v400
    %v1188 = vpop.permute.xlu0 %1187
    %1191 = vset.pattern.permute.xlu0 0
    %1192 = vperm.xlu0 %1191, %v401
    %v1193 = vpop.permute.xlu0 %1192
    %1196 = vset.pattern.permute.xlu0 0
    %1197 = vperm.xlu0 %1196, %v402
    %v1198 = vpop.permute.xlu0 %1197
    %1201 = vset.pattern.permute.xlu0 0
    %1202 = vperm.xlu0 %1201, %v403
    %v1203 = vpop.permute.xlu0 %1202
    %1206 = vset.pattern.permute.xlu0 0
    %1207 = vperm.xlu0 %1206, %v404
    %v1208 = vpop.permute.xlu0 %1207
    %1211 = vset.pattern.permute.xlu0 0
    %1212 = vperm.xlu0 %1211, %v405
    %v1213 = vpop.permute.xlu0 %1212
    %1216 = vset.pattern.permute.xlu0 0
    %1217 = vperm.xlu0 %1216, %v406
    %v1218 = vpop.permute.xlu0 %1217
    %1221 = vset.pattern.permute.xlu0 0
    %1222 = vperm.xlu0 %1221, %v407
    %v1223 = vpop.permute.xlu0 %1222
    %1226 = vset.pattern.permute.xlu0 0
    %1227 = vperm.xlu0 %1226, %v408
    %v1228 = vpop.permute.xlu0 %1227
    %1231 = vset.pattern.permute.xlu0 0
    %1232 = vperm.xlu0 %1231, %v409
    %v1233 = vpop.permute.xlu0 %1232
    %1236 = vset.pattern.permute.xlu0 0
    %1237 = vperm.xlu0 %1236, %v410
    %v1238 = vpop.permute.xlu0 %1237
    %1241 = vset.pattern.permute.xlu0 0
    %1242 = vperm.xlu0 %1241, %v411
    %v1243 = vpop.permute.xlu0 %1242
    %1246 = vset.pattern.permute.xlu0 0
    %1247 = vperm.xlu0 %1246, %v412
    %v1248 = vpop.permute.xlu0 %1247
    %1251 = vset.pattern.permute.xlu0 0
    %1252 = vperm.xlu0 %1251, %v413
    %v1253 = vpop.permute.xlu0 %1252
    %1256 = vset.pattern.permute.xlu0 0
    %1257 = vperm.xlu0 %1256, %v414
    %v1258 = vpop.permute.xlu0 %1257
    %1261 = vset.pattern.permute.xlu0 0
    %1262 = vperm.xlu0 %1261, %v415
    %v1263 = vpop.permute.xlu0 %1262
    %1266 = vset.pattern.permute.xlu0 0
    %1267 = vperm.xlu0 %1266, %v416
    %v1268 = vpop.permute.xlu0 %1267
    %1271 = vset.pattern.permute.xlu0 0
    %1272 = vperm.xlu0 %1271, %v417
    %v1273 = vpop.permute.xlu0 %1272
    %1276 = vset.pattern.permute.xlu0 0
    %1277 = vperm.xlu0 %1276, %v418
    %v1278 = vpop.permute.xlu0 %1277
    %1281 = vset.pattern.permute.xlu0 0
    %1282 = vperm.xlu0 %1281, %v419
    %v1283 = vpop.permute.xlu0 %1282
    %1286 = vset.pattern.permute.xlu0 0
    %1287 = vperm.xlu0 %1286, %v420
    %v1288 = vpop.permute.xlu0 %1287
    %1291 = vset.pattern.permute.xlu0 0
    %1292 = vperm.xlu0 %1291, %v421
    %v1293 = vpop.permute.xlu0 %1292
    %1296 = vset.pattern.permute.xlu0 0
    %1297 = vperm.xlu0 %1296, %v422
    %v1298 = vpop.permute.xlu0 %1297
    %1301 = vset.pattern.permute.xlu0 0
    %1302 = vperm.xlu0 %1301, %v423
    %v1303 = vpop.permute.xlu0 %1302
    %1306 = vset.pattern.permute.xlu0 0
    %1307 = vperm.xlu0 %1306, %v424
    %v1308 = vpop.permute.xlu0 %1307
    %1311 = vset.pattern.permute.xlu0 0
    %1312 = vperm.xlu0 %1311, %v425
    %v1313 = vpop.permute.xlu0 %1312
    %1316 = vset.pattern.permute.xlu0 0
    %1317 = vperm.xlu0 %1316, %v426
    %v1318 = vpop.permute.xlu0 %1317
    %1321 = vset.pattern.permute.xlu0 0
    %1322 = vperm.xlu0 %1321, %v427
    %v1323 = vpop.permute.xlu0 %1322
    %1326 = vset.pattern.permute.xlu0 0
    %1327 = vperm.xlu0 %1326, %v428
    %v1328 = vpop.permute.xlu0 %1327
    %1331 = vset.pattern.permute.xlu0 0
    %1332 = vperm.xlu0 %1331, %v429
    %v1333 = vpop.permute.xlu0 %1332
    %1336 = vset.pattern.permute.xlu0 0
    %1337 = vperm.xlu0 %1336, %v430
    %v1338 = vpop.permute.xlu0 %1337
    %1341 = vset.pattern.permute.xlu0 0
    %1342 = vperm.xlu0 %1341, %v431
    %v1343 = vpop.permute.xlu0 %1342
    %1346 = vset.pattern.permute.xlu0 0
    %1347 = vperm.xlu0 %1346, %v432
    %v1348 = vpop.permute.xlu0 %1347
    %1351 = vset.pattern.permute.xlu0 0
    %1352 = vperm.xlu0 %1351, %v433
    %v1353 = vpop.permute.xlu0 %1352
    %1356 = vset.pattern.permute.xlu0 0
    %1357 = vperm.xlu0 %1356, %v434
    %v1358 = vpop.permute.xlu0 %1357
    %1361 = vset.pattern.permute.xlu0 0
    %1362 = vperm.xlu0 %1361, %v435
    %v1363 = vpop.permute.xlu0 %1362
    %1366 = vset.pattern.permute.xlu0 0
    %1367 = vperm.xlu0 %1366, %v436
    %v1368 = vpop.permute.xlu0 %1367
    %1371 = vset.pattern.permute.xlu0 0
    %1372 = vperm.xlu0 %1371, %v437
    %v1373 = vpop.permute.xlu0 %1372
    %1376 = vset.pattern.permute.xlu0 0
    %1377 = vperm.xlu0 %1376, %v438
    %v1378 = vpop.permute.xlu0 %1377
    %1381 = vset.pattern.permute.xlu0 0
    %1382 = vperm.xlu0 %1381, %v439
    %v1383 = vpop.permute.xlu0 %1382
    %1386 = vset.pattern.permute.xlu0 0
    %1387 = vperm.xlu0 %1386, %v440
    %v1388 = vpop.permute.xlu0 %1387
    %1391 = vset.pattern.permute.xlu0 0
    %1392 = vperm.xlu0 %1391, %v441
    %v1393 = vpop.permute.xlu0 %1392
    %1396 = vset.pattern.permute.xlu0 0
    %1397 = vperm.xlu0 %1396, %v442
    %v1398 = vpop.permute.xlu0 %1397
    %1401 = vset.pattern.permute.xlu0 0
    %1402 = vperm.xlu0 %1401, %v443
    %v1403 = vpop.permute.xlu0 %1402
    %1406 = vset.pattern.permute.xlu0 0
    %1407 = vperm.xlu0 %1406, %v444
    %v1408 = vpop.permute.xlu0 %1407
    %1411 = vset.pattern.permute.xlu0 0
    %1412 = vperm.xlu0 %1411, %v445
    %v1413 = vpop.permute.xlu0 %1412
    %1416 = vset.pattern.permute.xlu0 0
    %1417 = vperm.xlu0 %1416, %v446
    %v1418 = vpop.permute.xlu0 %1417
    %1421 = vset.pattern.permute.xlu0 0
    %1422 = vperm.xlu0 %1421, %v447
    %v1423 = vpop.permute.xlu0 %1422
    %1426 = vset.pattern.permute.xlu0 0
    %1427 = vperm.xlu0 %1426, %v448
    %v1428 = vpop.permute.xlu0 %1427
    %1431 = vset.pattern.permute.xlu0 0
    %1432 = vperm.xlu0 %1431, %v449
    %v1433 = vpop.permute.xlu0 %1432
    %1436 = vset.pattern.permute.xlu0 0
    %1437 = vperm.xlu0 %1436, %v450
    %v1438 = vpop.permute.xlu0 %1437
    %1441 = vset.pattern.permute.xlu0 0
    %1442 = vperm.xlu0 %1441, %v451
    %v1443 = vpop.permute.xlu0 %1442
    %1446 = vset.pattern.permute.xlu0 0
    %1447 = vperm.xlu0 %1446, %v452
    %v1448 = vpop.permute.xlu0 %1447
    %1451 = vset.pattern.permute.xlu0 0
    %1452 = vperm.xlu0 %1451, %v453
    %v1453 = vpop.permute.xlu0 %1452
    %1456 = vset.pattern.permute.xlu0 0
    %1457 = vperm.xlu0 %1456, %v454
    %v1458 = vpop.permute.xlu0 %1457
    %1461 = vset.pattern.permute.xlu0 0
    %1462 = vperm.xlu0 %1461, %v455
    %v1463 = vpop.permute.xlu0 %1462
    %1466 = vset.pattern.permute.xlu0 0
    %1467 = vperm.xlu0 %1466, %v456
    %v1468 = vpop.permute.xlu0 %1467
    %1471 = vset.pattern.permute.xlu0 0
    %1472 = vperm.xlu0 %1471, %v457
    %v1473 = vpop.permute.xlu0 %1472
    %1476 = vset.pattern.permute.xlu0 0
    %1477 = vperm.xlu0 %1476, %v458
    %v1478 = vpop.permute.xlu0 %1477
    %1481 = vset.pattern.permute.xlu0 0
    %1482 = vperm.xlu0 %1481, %v459
    %v1483 = vpop.permute.xlu0 %1482
    %1486 = vset.pattern.permute.xlu0 0
    %1487 = vperm.xlu0 %1486, %v460
    %v1488 = vpop.permute.xlu0 %1487
    %1491 = vset.pattern.permute.xlu0 0
    %1492 = vperm.xlu0 %1491, %v461
    %v1493 = vpop.permute.xlu0 %1492
    %1496 = vset.pattern.permute.xlu0 0
    %1497 = vperm.xlu0 %1496, %v462
    %v1498 = vpop.permute.xlu0 %1497
    %1501 = vset.pattern.permute.xlu0 0
    %1502 = vperm.xlu0 %1501, %v463
    %v1503 = vpop.permute.xlu0 %1502
    %1506 = vset.pattern.permute.xlu0 0
    %1507 = vperm.xlu0 %1506, %v464
    %v1508 = vpop.permute.xlu0 %1507
    %1511 = vset.pattern.permute.xlu0 0
    %1512 = vperm.xlu0 %1511, %v465
    %v1513 = vpop.permute.xlu0 %1512
    %1516 = vset.pattern.permute.xlu0 0
    %1517 = vperm.xlu0 %1516, %v466
    %v1518 = vpop.permute.xlu0 %1517
    %1521 = vset.pattern.permute.xlu0 0
    %1522 = vperm.xlu0 %1521, %v467
    %v1523 = vpop.permute.xlu0 %1522
    %1526 = vset.pattern.permute.xlu0 0
    %1527 = vperm.xlu0 %1526, %v468
    %v1528 = vpop.permute.xlu0 %1527
    %1531 = vset.pattern.permute.xlu0 0
    %1532 = vperm.xlu0 %1531, %v469
    %v1533 = vpop.permute.xlu0 %1532
    %1536 = vset.pattern.permute.xlu0 0
    %1537 = vperm.xlu0 %1536, %v470
    %v1538 = vpop.permute.xlu0 %1537
    %1541 = vset.pattern.permute.xlu0 0
    %1542 = vperm.xlu0 %1541, %v471
    %v1543 = vpop.permute.xlu0 %1542
    %1546 = vset.pattern.permute.xlu0 0
    %1547 = vperm.xlu0 %1546, %v472
    %v1548 = vpop.permute.xlu0 %1547
    %1551 = vset.pattern.permute.xlu0 0
    %1552 = vperm.xlu0 %1551, %v473
    %v1553 = vpop.permute.xlu0 %1552
    %1556 = vset.pattern.permute.xlu0 0
    %1557 = vperm.xlu0 %1556, %v474
    %v1558 = vpop.permute.xlu0 %1557
    %1561 = vset.pattern.permute.xlu0 0
    %1562 = vperm.xlu0 %1561, %v475
    %v1563 = vpop.permute.xlu0 %1562
    %1566 = vset.pattern.permute.xlu0 0
    %1567 = vperm.xlu0 %1566, %v476
    %v1568 = vpop.permute.xlu0 %1567
    %1571 = vset.pattern.permute.xlu0 0
    %1572 = vperm.xlu0 %1571, %v477
    %v1573 = vpop.permute.xlu0 %1572
    %1576 = vset.pattern.permute.xlu0 0
    %1577 = vperm.xlu0 %1576, %v478
    %v1578 = vpop.permute.xlu0 %1577
    %1581 = vset.pattern.permute.xlu0 0
    %1582 = vperm.xlu0 %1581, %v479
    %v1583 = vpop.permute.xlu0 %1582
    %1586 = vset.pattern.permute.xlu0 0
    %1587 = vperm.xlu0 %1586, %v480
    %v1588 = vpop.permute.xlu0 %1587
    %1591 = vset.pattern.permute.xlu0 0
    %1592 = vperm.xlu0 %1591, %v481
    %v1593 = vpop.permute.xlu0 %1592
    %1596 = vset.pattern.permute.xlu0 0
    %1597 = vperm.xlu0 %1596, %v482
    %v1598 = vpop.permute.xlu0 %1597
    %1601 = vset.pattern.permute.xlu0 0
    %1602 = vperm.xlu0 %1601, %v483
    %v1603 = vpop.permute.xlu0 %1602
    %1606 = vset.pattern.permute.xlu0 0
    %1607 = vperm.xlu0 %1606, %v484
    %v1608 = vpop.permute.xlu0 %1607
    %1611 = vset.pattern.permute.xlu0 0
    %1612 = vperm.xlu0 %1611, %v485
    %v1613 = vpop.permute.xlu0 %1612
    %1616 = vset.pattern.permute.xlu0 0
    %1617 = vperm.xlu0 %1616, %v486
    %v1618 = vpop.permute.xlu0 %1617
    %1621 = vset.pattern.permute.xlu0 0
    %1622 = vperm.xlu0 %1621, %v487
    %v1623 = vpop.permute.xlu0 %1622
    %1626 = vset.pattern.permute.xlu0 0
    %1627 = vperm.xlu0 %1626, %v488
    %v1628 = vpop.permute.xlu0 %1627
    %1631 = vset.pattern.permute.xlu0 0
    %1632 = vperm.xlu0 %1631, %v489
    %v1633 = vpop.permute.xlu0 %1632
    %1636 = vset.pattern.permute.xlu0 0
    %1637 = vperm.xlu0 %1636, %v490
    %v1638 = vpop.permute.xlu0 %1637
    %1641 = vset.pattern.permute.xlu0 0
    %1642 = vperm.xlu0 %1641, %v491
    %v1643 = vpop.permute.xlu0 %1642
    %1646 = vset.pattern.permute.xlu0 0
    %1647 = vperm.xlu0 %1646, %v492
    %v1648 = vpop.permute.xlu0 %1647
    %1651 = vset.pattern.permute.xlu0 0
    %1652 = vperm.xlu0 %1651, %v493
    %v1653 = vpop.permute.xlu0 %1652
    %1656 = vset.pattern.permute.xlu0 0
    %1657 = vperm.xlu0 %1656, %v494
    %v1658 = vpop.permute.xlu0 %1657
    %1661 = vset.pattern.permute.xlu0 0
    %1662 = vperm.xlu0 %1661, %v495
    %v1663 = vpop.permute.xlu0 %1662
    %1666 = vset.pattern.permute.xlu0 0
    %1667 = vperm.xlu0 %1666, %v496
    %v1668 = vpop.permute.xlu0 %1667
    %1671 = vset.pattern.permute.xlu0 0
    %1672 = vperm.xlu0 %1671, %v497
    %v1673 = vpop.permute.xlu0 %1672
    %1676 = vset.pattern.permute.xlu0 0
    %1677 = vperm.xlu0 %1676, %v498
    %v1678 = vpop.permute.xlu0 %1677
    %1681 = vset.pattern.permute.xlu0 0
    %1682 = vperm.xlu0 %1681, %v499
    %v1683 = vpop.permute.xlu0 %1682
    %1686 = vset.pattern.permute.xlu0 0
    %1687 = vperm.xlu0 %1686, %v500
    %v1688 = vpop.permute.xlu0 %1687
    %1691 = vset.pattern.permute.xlu0 0
    %1692 = vperm.xlu0 %1691, %v501
    %v1693 = vpop.permute.xlu0 %1692
    %1696 = vset.pattern.permute.xlu0 0
    %1697 = vperm.xlu0 %1696, %v502
    %v1698 = vpop.permute.xlu0 %1697
    %1701 = vset.pattern.permute.xlu0 0
    %1702 = vperm.xlu0 %1701, %v503
    %v1703 = vpop.permute.xlu0 %1702
    %1706 = vset.pattern.permute.xlu0 0
    %1707 = vperm.xlu0 %1706, %v504
    %v1708 = vpop.permute.xlu0 %1707
    %1711 = vset.pattern.permute.xlu0 0
    %1712 = vperm.xlu0 %1711, %v505
    %v1713 = vpop.permute.xlu0 %1712
    %1716 = vset.pattern.permute.xlu0 0
    %1717 = vperm.xlu0 %1716, %v506
    %v1718 = vpop.permute.xlu0 %1717
    %1721 = vset.pattern.permute.xlu0 0
    %1722 = vperm.xlu0 %1721, %v507
    %v1723 = vpop.permute.xlu0 %1722
    %1726 = vset.pattern.permute.xlu0 0
    %1727 = vperm.xlu0 %1726, %v508
    %v1728 = vpop.permute.xlu0 %1727
    %1731 = vset.pattern.permute.xlu0 0
    %1732 = vperm.xlu0 %1731, %v509
    %v1733 = vpop.permute.xlu0 %1732
    %1736 = vset.pattern.permute.xlu0 0
    %1737 = vperm.xlu0 %1736, %v510
    %v1738 = vpop.permute.xlu0 %1737
    %1741 = vset.pattern.permute.xlu0 0
    %1742 = vperm.xlu0 %1741, %v511
    %v1743 = vpop.permute.xlu0 %1742
    %1746 = vset.pattern.permute.xlu0 0
    %1747 = vperm.xlu0 %1746, %v512
    %v1748 = vpop.permute.xlu0 %1747
    %1751 = vset.pattern.permute.xlu0 0
    %1752 = vperm.xlu0 %1751, %v513
    %v1753 = vpop.permute.xlu0 %1752
    %1756 = vset.pattern.permute.xlu0 0
    %1757 = vperm.xlu0 %1756, %v514
    %v1758 = vpop.permute.xlu0 %1757
    %1761 = vset.pattern.permute.xlu0 0
    %1762 = vperm.xlu0 %1761, %v515
    %v1763 = vpop.permute.xlu0 %1762
    %1766 = vset.pattern.permute.xlu0 0
    %1767 = vperm.xlu0 %1766, %v516
    %v1768 = vpop.permute.xlu0 %1767
    %1771 = vset.pattern.permute.xlu0 0
    %1772 = vperm.xlu0 %1771, %v517
    %v1773 = vpop.permute.xlu0 %1772
    %1776 = vset.pattern.permute.xlu0 0
    %1777 = vperm.xlu0 %1776, %v518
    %v1778 = vpop.permute.xlu0 %1777
    %1781 = vset.pattern.permute.xlu0 0
    %1782 = vperm.xlu0 %1781, %v519
    %v1783 = vpop.permute.xlu0 %1782
    %1786 = vset.pattern.permute.xlu0 0
    %1787 = vperm.xlu0 %1786, %v520
    %v1788 = vpop.permute.xlu0 %1787
    %1791 = vset.pattern.permute.xlu0 0
    %1792 = vperm.xlu0 %1791, %v521
    %v1793 = vpop.permute.xlu0 %1792
    %1796 = vset.pattern.permute.xlu0 0
    %1797 = vperm.xlu0 %1796, %v522
    %v1798 = vpop.permute.xlu0 %1797
    %1801 = vset.pattern.permute.xlu0 0
    %1802 = vperm.xlu0 %1801, %v523
    %v1803 = vpop.permute.xlu0 %1802
    %v1806 = vperm.slane %v524, 0
    %v1808 = vsub.f32 %v528, %v1806
    %v1809 = vsub.f32 %v533, %v1806
    %v1810 = vsub.f32 %v538, %v1806
    %v1811 = vsub.f32 %v543, %v1806
    %v1812 = vsub.f32 %v548, %v1806
    %v1813 = vsub.f32 %v553, %v1806
    %v1814 = vsub.f32 %v558, %v1806
    %v1815 = vsub.f32 %v563, %v1806
    %v1816 = vsub.f32 %v568, %v1806
    %v1817 = vsub.f32 %v573, %v1806
    %v1818 = vsub.f32 %v578, %v1806
    %v1819 = vsub.f32 %v583, %v1806
    %v1820 = vsub.f32 %v588, %v1806
    %v1821 = vsub.f32 %v593, %v1806
    %v1822 = vsub.f32 %v598, %v1806
    %v1823 = vsub.f32 %v603, %v1806
    %v1824 = vsub.f32 %v608, %v1806
    %v1825 = vsub.f32 %v613, %v1806
    %v1826 = vsub.f32 %v618, %v1806
    %v1827 = vsub.f32 %v623, %v1806
    %v1828 = vsub.f32 %v628, %v1806
    %v1829 = vsub.f32 %v633, %v1806
    %v1830 = vsub.f32 %v638, %v1806
    %v1831 = vsub.f32 %v643, %v1806
    %v1832 = vsub.f32 %v648, %v1806
    %v1833 = vsub.f32 %v653, %v1806
    %v1834 = vsub.f32 %v658, %v1806
    %v1835 = vsub.f32 %v663, %v1806
    %v1836 = vsub.f32 %v668, %v1806
    %v1837 = vsub.f32 %v673, %v1806
    %v1838 = vsub.f32 %v678, %v1806
    %v1839 = vsub.f32 %v683, %v1806
    %v1840 = vsub.f32 %v688, %v1806
    %v1841 = vsub.f32 %v693, %v1806
    %v1842 = vsub.f32 %v698, %v1806
    %v1843 = vsub.f32 %v703, %v1806
    %v1844 = vsub.f32 %v708, %v1806
    %v1845 = vsub.f32 %v713, %v1806
    %v1846 = vsub.f32 %v718, %v1806
    %v1847 = vsub.f32 %v723, %v1806
    %v1848 = vsub.f32 %v728, %v1806
    %v1849 = vsub.f32 %v733, %v1806
    %v1850 = vsub.f32 %v738, %v1806
    %v1851 = vsub.f32 %v743, %v1806
    %v1852 = vsub.f32 %v748, %v1806
    %v1853 = vsub.f32 %v753, %v1806
    %v1854 = vsub.f32 %v758, %v1806
    %v1855 = vsub.f32 %v763, %v1806
    %v1856 = vsub.f32 %v768, %v1806
    %v1857 = vsub.f32 %v773, %v1806
    %v1858 = vsub.f32 %v778, %v1806
    %v1859 = vsub.f32 %v783, %v1806
    %v1860 = vsub.f32 %v788, %v1806
    %v1861 = vsub.f32 %v793, %v1806
    %v1862 = vsub.f32 %v798, %v1806
    %v1863 = vsub.f32 %v803, %v1806
    %v1864 = vsub.f32 %v808, %v1806
    %v1865 = vsub.f32 %v813, %v1806
    %v1866 = vsub.f32 %v818, %v1806
    %v1867 = vsub.f32 %v823, %v1806
    %v1868 = vsub.f32 %v828, %v1806
    %v1869 = vsub.f32 %v833, %v1806
    %v1870 = vsub.f32 %v838, %v1806
    %v1871 = vsub.f32 %v843, %v1806
    %v1872 = vsub.f32 %v848, %v1806
    %v1873 = vsub.f32 %v853, %v1806
    %v1874 = vsub.f32 %v858, %v1806
    %v1875 = vsub.f32 %v863, %v1806
    %v1876 = vsub.f32 %v868, %v1806
    %v1877 = vsub.f32 %v873, %v1806
    %v1878 = vsub.f32 %v878, %v1806
    %v1879 = vsub.f32 %v883, %v1806
    %v1880 = vsub.f32 %v888, %v1806
    %v1881 = vsub.f32 %v893, %v1806
    %v1882 = vsub.f32 %v898, %v1806
    %v1883 = vsub.f32 %v903, %v1806
    %v1884 = vsub.f32 %v908, %v1806
    %v1885 = vsub.f32 %v913, %v1806
    %v1886 = vsub.f32 %v918, %v1806
    %v1887 = vsub.f32 %v923, %v1806
    %v1888 = vsub.f32 %v928, %v1806
    %v1889 = vsub.f32 %v933, %v1806
    %v1890 = vsub.f32 %v938, %v1806
    %v1891 = vsub.f32 %v943, %v1806
    %v1892 = vsub.f32 %v948, %v1806
    %v1893 = vsub.f32 %v953, %v1806
    %v1894 = vsub.f32 %v958, %v1806
    %v1895 = vsub.f32 %v963, %v1806
    %v1896 = vsub.f32 %v968, %v1806
    %v1897 = vsub.f32 %v973, %v1806
    %v1898 = vsub.f32 %v978, %v1806
    %v1899 = vsub.f32 %v983, %v1806
    %v1900 = vsub.f32 %v988, %v1806
    %v1901 = vsub.f32 %v993, %v1806
    %v1902 = vsub.f32 %v998, %v1806
    %v1903 = vsub.f32 %v1003, %v1806
    %v1904 = vsub.f32 %v1008, %v1806
    %v1905 = vsub.f32 %v1013, %v1806
    %v1906 = vsub.f32 %v1018, %v1806
    %v1907 = vsub.f32 %v1023, %v1806
    %v1908 = vsub.f32 %v1028, %v1806
    %v1909 = vsub.f32 %v1033, %v1806
    %v1910 = vsub.f32 %v1038, %v1806
    %v1911 = vsub.f32 %v1043, %v1806
    %v1912 = vsub.f32 %v1048, %v1806
    %v1913 = vsub.f32 %v1053, %v1806
    %v1914 = vsub.f32 %v1058, %v1806
    %v1915 = vsub.f32 %v1063, %v1806
    %v1916 = vsub.f32 %v1068, %v1806
    %v1917 = vsub.f32 %v1073, %v1806
    %v1918 = vsub.f32 %v1078, %v1806
    %v1919 = vsub.f32 %v1083, %v1806
    %v1920 = vsub.f32 %v1088, %v1806
    %v1921 = vsub.f32 %v1093, %v1806
    %v1922 = vsub.f32 %v1098, %v1806
    %v1923 = vsub.f32 %v1103, %v1806
    %v1924 = vsub.f32 %v1108, %v1806
    %v1925 = vsub.f32 %v1113, %v1806
    %v1926 = vsub.f32 %v1118, %v1806
    %v1927 = vsub.f32 %v1123, %v1806
    %v1928 = vsub.f32 %v1128, %v1806
    %v1929 = vsub.f32 %v1133, %v1806
    %v1930 = vsub.f32 %v1138, %v1806
    %v1931 = vsub.f32 %v1143, %v1806
    %v1932 = vsub.f32 %v1148, %v1806
    %v1933 = vsub.f32 %v1153, %v1806
    %v1934 = vsub.f32 %v1158, %v1806
    %v1935 = vsub.f32 %v1163, %v1806
    %v1936 = vsub.f32 %v1168, %v1806
    %v1937 = vsub.f32 %v1173, %v1806
    %v1938 = vsub.f32 %v1178, %v1806
    %v1939 = vsub.f32 %v1183, %v1806
    %v1940 = vsub.f32 %v1188, %v1806
    %v1941 = vsub.f32 %v1193, %v1806
    %v1942 = vsub.f32 %v1198, %v1806
    %v1943 = vsub.f32 %v1203, %v1806
    %v1944 = vsub.f32 %v1208, %v1806
    %v1945 = vsub.f32 %v1213, %v1806
    %v1946 = vsub.f32 %v1218, %v1806
    %v1947 = vsub.f32 %v1223, %v1806
    %v1948 = vsub.f32 %v1228, %v1806
    %v1949 = vsub.f32 %v1233, %v1806
    %v1950 = vsub.f32 %v1238, %v1806
    %v1951 = vsub.f32 %v1243, %v1806
    %v1952 = vsub.f32 %v1248, %v1806
    %v1953 = vsub.f32 %v1253, %v1806
    %v1954 = vsub.f32 %v1258, %v1806
    %v1955 = vsub.f32 %v1263, %v1806
    %v1956 = vsub.f32 %v1268, %v1806
    %v1957 = vsub.f32 %v1273, %v1806
    %v1958 = vsub.f32 %v1278, %v1806
    %v1959 = vsub.f32 %v1283, %v1806
    %v1960 = vsub.f32 %v1288, %v1806
    %v1961 = vsub.f32 %v1293, %v1806
    %v1962 = vsub.f32 %v1298, %v1806
    %v1963 = vsub.f32 %v1303, %v1806
    %v1964 = vsub.f32 %v1308, %v1806
    %v1965 = vsub.f32 %v1313, %v1806
    %v1966 = vsub.f32 %v1318, %v1806
    %v1967 = vsub.f32 %v1323, %v1806
    %v1968 = vsub.f32 %v1328, %v1806
    %v1969 = vsub.f32 %v1333, %v1806
    %v1970 = vsub.f32 %v1338, %v1806
    %v1971 = vsub.f32 %v1343, %v1806
    %v1972 = vsub.f32 %v1348, %v1806
    %v1973 = vsub.f32 %v1353, %v1806
    %v1974 = vsub.f32 %v1358, %v1806
    %v1975 = vsub.f32 %v1363, %v1806
    %v1976 = vsub.f32 %v1368, %v1806
    %v1977 = vsub.f32 %v1373, %v1806
    %v1978 = vsub.f32 %v1378, %v1806
    %v1979 = vsub.f32 %v1383, %v1806
    %v1980 = vsub.f32 %v1388, %v1806
    %v1981 = vsub.f32 %v1393, %v1806
    %v1982 = vsub.f32 %v1398, %v1806
    %v1983 = vsub.f32 %v1403, %v1806
    %v1984 = vsub.f32 %v1408, %v1806
    %v1985 = vsub.f32 %v1413, %v1806
    %v1986 = vsub.f32 %v1418, %v1806
    %v1987 = vsub.f32 %v1423, %v1806
    %v1988 = vsub.f32 %v1428, %v1806
    %v1989 = vsub.f32 %v1433, %v1806
    %v1990 = vsub.f32 %v1438, %v1806
    %v1991 = vsub.f32 %v1443, %v1806
    %v1992 = vsub.f32 %v1448, %v1806
    %v1993 = vsub.f32 %v1453, %v1806
    %v1994 = vsub.f32 %v1458, %v1806
    %v1995 = vsub.f32 %v1463, %v1806
    %v1996 = vsub.f32 %v1468, %v1806
    %v1997 = vsub.f32 %v1473, %v1806
    %v1998 = vsub.f32 %v1478, %v1806
    %v1999 = vsub.f32 %v1483, %v1806
    %v2000 = vsub.f32 %v1488, %v1806
    %v2001 = vsub.f32 %v1493, %v1806
    %v2002 = vsub.f32 %v1498, %v1806
    %v2003 = vsub.f32 %v1503, %v1806
    %v2004 = vsub.f32 %v1508, %v1806
    %v2005 = vsub.f32 %v1513, %v1806
    %v2006 = vsub.f32 %v1518, %v1806
    %v2007 = vsub.f32 %v1523, %v1806
    %v2008 = vsub.f32 %v1528, %v1806
    %v2009 = vsub.f32 %v1533, %v1806
    %v2010 = vsub.f32 %v1538, %v1806
    %v2011 = vsub.f32 %v1543, %v1806
    %v2012 = vsub.f32 %v1548, %v1806
    %v2013 = vsub.f32 %v1553, %v1806
    %v2014 = vsub.f32 %v1558, %v1806
    %v2015 = vsub.f32 %v1563, %v1806
    %v2016 = vsub.f32 %v1568, %v1806
    %v2017 = vsub.f32 %v1573, %v1806
    %v2018 = vsub.f32 %v1578, %v1806
    %v2019 = vsub.f32 %v1583, %v1806
    %v2020 = vsub.f32 %v1588, %v1806
    %v2021 = vsub.f32 %v1593, %v1806
    %v2022 = vsub.f32 %v1598, %v1806
    %v2023 = vsub.f32 %v1603, %v1806
    %v2024 = vsub.f32 %v1608, %v1806
    %v2025 = vsub.f32 %v1613, %v1806
    %v2026 = vsub.f32 %v1618, %v1806
    %v2027 = vsub.f32 %v1623, %v1806
    %v2028 = vsub.f32 %v1628, %v1806
    %v2029 = vsub.f32 %v1633, %v1806
    %v2030 = vsub.f32 %v1638, %v1806
    %v2031 = vsub.f32 %v1643, %v1806
    %v2032 = vsub.f32 %v1648, %v1806
    %v2033 = vsub.f32 %v1653, %v1806
    %v2034 = vsub.f32 %v1658, %v1806
    %v2035 = vsub.f32 %v1663, %v1806
    %v2036 = vsub.f32 %v1668, %v1806
    %v2037 = vsub.f32 %v1673, %v1806
    %v2038 = vsub.f32 %v1678, %v1806
    %v2039 = vsub.f32 %v1683, %v1806
    %v2040 = vsub.f32 %v1688, %v1806
    %v2041 = vsub.f32 %v1693, %v1806
    %v2042 = vsub.f32 %v1698, %v1806
    %v2043 = vsub.f32 %v1703, %v1806
    %v2044 = vsub.f32 %v1708, %v1806
    %v2045 = vsub.f32 %v1713, %v1806
    %v2046 = vsub.f32 %v1718, %v1806
    %v2047 = vsub.f32 %v1723, %v1806
    %v2048 = vsub.f32 %v1728, %v1806
    %v2049 = vsub.f32 %v1733, %v1806
    %v2050 = vsub.f32 %v1738, %v1806
    %v2051 = vsub.f32 %v1743, %v1806
    %v2052 = vsub.f32 %v1748, %v1806
    %v2053 = vsub.f32 %v1753, %v1806
    %v2054 = vsub.f32 %v1758, %v1806
    %v2055 = vsub.f32 %v1763, %v1806
    %v2056 = vsub.f32 %v1768, %v1806
    %v2057 = vsub.f32 %v1773, %v1806
    %v2058 = vsub.f32 %v1778, %v1806
    %v2059 = vsub.f32 %v1783, %v1806
    %v2060 = vsub.f32 %v1788, %v1806
    %v2061 = vsub.f32 %v1793, %v1806
    %v2062 = vsub.f32 %v1798, %v1806
    %v2063 = vsub.f32 %v1803, %v1806
    %v2064 = vmul.f32 %v1808, %v1808
    %v2065 = vmul.f32 %v1809, %v1809
    %v2066 = vmul.f32 %v1810, %v1810
    %v2067 = vmul.f32 %v1811, %v1811
    %v2068 = vmul.f32 %v1812, %v1812
    %v2069 = vmul.f32 %v1813, %v1813
    %v2070 = vmul.f32 %v1814, %v1814
    %v2071 = vmul.f32 %v1815, %v1815
    %v2072 = vmul.f32 %v1816, %v1816
    %v2073 = vmul.f32 %v1817, %v1817
    %v2074 = vmul.f32 %v1818, %v1818
    %v2075 = vmul.f32 %v1819, %v1819
    %v2076 = vmul.f32 %v1820, %v1820
    %v2077 = vmul.f32 %v1821, %v1821
    %v2078 = vmul.f32 %v1822, %v1822
    %v2079 = vmul.f32 %v1823, %v1823
    %v2080 = vmul.f32 %v1824, %v1824
    %v2081 = vmul.f32 %v1825, %v1825
    %v2082 = vmul.f32 %v1826, %v1826
    %v2083 = vmul.f32 %v1827, %v1827
    %v2084 = vmul.f32 %v1828, %v1828
    %v2085 = vmul.f32 %v1829, %v1829
    %v2086 = vmul.f32 %v1830, %v1830
    %v2087 = vmul.f32 %v1831, %v1831
    %v2088 = vmul.f32 %v1832, %v1832
    %v2089 = vmul.f32 %v1833, %v1833
    %v2090 = vmul.f32 %v1834, %v1834
    %v2091 = vmul.f32 %v1835, %v1835
    %v2092 = vmul.f32 %v1836, %v1836
    %v2093 = vmul.f32 %v1837, %v1837
    %v2094 = vmul.f32 %v1838, %v1838
    %v2095 = vmul.f32 %v1839, %v1839
    %v2096 = vmul.f32 %v1840, %v1840
    %v2097 = vmul.f32 %v1841, %v1841
    %v2098 = vmul.f32 %v1842, %v1842
    %v2099 = vmul.f32 %v1843, %v1843
    %v2100 = vmul.f32 %v1844, %v1844
    %v2101 = vmul.f32 %v1845, %v1845
    %v2102 = vmul.f32 %v1846, %v1846
    %v2103 = vmul.f32 %v1847, %v1847
    %v2104 = vmul.f32 %v1848, %v1848
    %v2105 = vmul.f32 %v1849, %v1849
    %v2106 = vmul.f32 %v1850, %v1850
    %v2107 = vmul.f32 %v1851, %v1851
    %v2108 = vmul.f32 %v1852, %v1852
    %v2109 = vmul.f32 %v1853, %v1853
    %v2110 = vmul.f32 %v1854, %v1854
    %v2111 = vmul.f32 %v1855, %v1855
    %v2112 = vmul.f32 %v1856, %v1856
    %v2113 = vmul.f32 %v1857, %v1857
    %v2114 = vmul.f32 %v1858, %v1858
    %v2115 = vmul.f32 %v1859, %v1859
    %v2116 = vmul.f32 %v1860, %v1860
    %v2117 = vmul.f32 %v1861, %v1861
    %v2118 = vmul.f32 %v1862, %v1862
    %v2119 = vmul.f32 %v1863, %v1863
    %v2120 = vmul.f32 %v1864, %v1864
    %v2121 = vmul.f32 %v1865, %v1865
    %v2122 = vmul.f32 %v1866, %v1866
    %v2123 = vmul.f32 %v1867, %v1867
    %v2124 = vmul.f32 %v1868, %v1868
    %v2125 = vmul.f32 %v1869, %v1869
    %v2126 = vmul.f32 %v1870, %v1870
    %v2127 = vmul.f32 %v1871, %v1871
    %v2128 = vmul.f32 %v1872, %v1872
    %v2129 = vmul.f32 %v1873, %v1873
    %v2130 = vmul.f32 %v1874, %v1874
    %v2131 = vmul.f32 %v1875, %v1875
    %v2132 = vmul.f32 %v1876, %v1876
    %v2133 = vmul.f32 %v1877, %v1877
    %v2134 = vmul.f32 %v1878, %v1878
    %v2135 = vmul.f32 %v1879, %v1879
    %v2136 = vmul.f32 %v1880, %v1880
    %v2137 = vmul.f32 %v1881, %v1881
    %v2138 = vmul.f32 %v1882, %v1882
    %v2139 = vmul.f32 %v1883, %v1883
    %v2140 = vmul.f32 %v1884, %v1884
    %v2141 = vmul.f32 %v1885, %v1885
    %v2142 = vmul.f32 %v1886, %v1886
    %v2143 = vmul.f32 %v1887, %v1887
    %v2144 = vmul.f32 %v1888, %v1888
    %v2145 = vmul.f32 %v1889, %v1889
    %v2146 = vmul.f32 %v1890, %v1890
    %v2147 = vmul.f32 %v1891, %v1891
    %v2148 = vmul.f32 %v1892, %v1892
    %v2149 = vmul.f32 %v1893, %v1893
    %v2150 = vmul.f32 %v1894, %v1894
    %v2151 = vmul.f32 %v1895, %v1895
    %v2152 = vmul.f32 %v1896, %v1896
    %v2153 = vmul.f32 %v1897, %v1897
    %v2154 = vmul.f32 %v1898, %v1898
    %v2155 = vmul.f32 %v1899, %v1899
    %v2156 = vmul.f32 %v1900, %v1900
    %v2157 = vmul.f32 %v1901, %v1901
    %v2158 = vmul.f32 %v1902, %v1902
    %v2159 = vmul.f32 %v1903, %v1903
    %v2160 = vmul.f32 %v1904, %v1904
    %v2161 = vmul.f32 %v1905, %v1905
    %v2162 = vmul.f32 %v1906, %v1906
    %v2163 = vmul.f32 %v1907, %v1907
    %v2164 = vmul.f32 %v1908, %v1908
    %v2165 = vmul.f32 %v1909, %v1909
    %v2166 = vmul.f32 %v1910, %v1910
    %v2167 = vmul.f32 %v1911, %v1911
    %v2168 = vmul.f32 %v1912, %v1912
    %v2169 = vmul.f32 %v1913, %v1913
    %v2170 = vmul.f32 %v1914, %v1914
    %v2171 = vmul.f32 %v1915, %v1915
    %v2172 = vmul.f32 %v1916, %v1916
    %v2173 = vmul.f32 %v1917, %v1917
    %v2174 = vmul.f32 %v1918, %v1918
    %v2175 = vmul.f32 %v1919, %v1919
    %v2176 = vmul.f32 %v1920, %v1920
    %v2177 = vmul.f32 %v1921, %v1921
    %v2178 = vmul.f32 %v1922, %v1922
    %v2179 = vmul.f32 %v1923, %v1923
    %v2180 = vmul.f32 %v1924, %v1924
    %v2181 = vmul.f32 %v1925, %v1925
    %v2182 = vmul.f32 %v1926, %v1926
    %v2183 = vmul.f32 %v1927, %v1927
    %v2184 = vmul.f32 %v1928, %v1928
    %v2185 = vmul.f32 %v1929, %v1929
    %v2186 = vmul.f32 %v1930, %v1930
    %v2187 = vmul.f32 %v1931, %v1931
    %v2188 = vmul.f32 %v1932, %v1932
    %v2189 = vmul.f32 %v1933, %v1933
    %v2190 = vmul.f32 %v1934, %v1934
    %v2191 = vmul.f32 %v1935, %v1935
    %v2192 = vmul.f32 %v1936, %v1936
    %v2193 = vmul.f32 %v1937, %v1937
    %v2194 = vmul.f32 %v1938, %v1938
    %v2195 = vmul.f32 %v1939, %v1939
    %v2196 = vmul.f32 %v1940, %v1940
    %v2197 = vmul.f32 %v1941, %v1941
    %v2198 = vmul.f32 %v1942, %v1942
    %v2199 = vmul.f32 %v1943, %v1943
    %v2200 = vmul.f32 %v1944, %v1944
    %v2201 = vmul.f32 %v1945, %v1945
    %v2202 = vmul.f32 %v1946, %v1946
    %v2203 = vmul.f32 %v1947, %v1947
    %v2204 = vmul.f32 %v1948, %v1948
    %v2205 = vmul.f32 %v1949, %v1949
    %v2206 = vmul.f32 %v1950, %v1950
    %v2207 = vmul.f32 %v1951, %v1951
    %v2208 = vmul.f32 %v1952, %v1952
    %v2209 = vmul.f32 %v1953, %v1953
    %v2210 = vmul.f32 %v1954, %v1954
    %v2211 = vmul.f32 %v1955, %v1955
    %v2212 = vmul.f32 %v1956, %v1956
    %v2213 = vmul.f32 %v1957, %v1957
    %v2214 = vmul.f32 %v1958, %v1958
    %v2215 = vmul.f32 %v1959, %v1959
    %v2216 = vmul.f32 %v1960, %v1960
    %v2217 = vmul.f32 %v1961, %v1961
    %v2218 = vmul.f32 %v1962, %v1962
    %v2219 = vmul.f32 %v1963, %v1963
    %v2220 = vmul.f32 %v1964, %v1964
    %v2221 = vmul.f32 %v1965, %v1965
    %v2222 = vmul.f32 %v1966, %v1966
    %v2223 = vmul.f32 %v1967, %v1967
    %v2224 = vmul.f32 %v1968, %v1968
    %v2225 = vmul.f32 %v1969, %v1969
    %v2226 = vmul.f32 %v1970, %v1970
    %v2227 = vmul.f32 %v1971, %v1971
    %v2228 = vmul.f32 %v1972, %v1972
    %v2229 = vmul.f32 %v1973, %v1973
    %v2230 = vmul.f32 %v1974, %v1974
    %v2231 = vmul.f32 %v1975, %v1975
    %v2232 = vmul.f32 %v1976, %v1976
    %v2233 = vmul.f32 %v1977, %v1977
    %v2234 = vmul.f32 %v1978, %v1978
    %v2235 = vmul.f32 %v1979, %v1979
    %v2236 = vmul.f32 %v1980, %v1980
    %v2237 = vmul.f32 %v1981, %v1981
    %v2238 = vmul.f32 %v1982, %v1982
    %v2239 = vmul.f32 %v1983, %v1983
    %v2240 = vmul.f32 %v1984, %v1984
    %v2241 = vmul.f32 %v1985, %v1985
    %v2242 = vmul.f32 %v1986, %v1986
    %v2243 = vmul.f32 %v1987, %v1987
    %v2244 = vmul.f32 %v1988, %v1988
    %v2245 = vmul.f32 %v1989, %v1989
    %v2246 = vmul.f32 %v1990, %v1990
    %v2247 = vmul.f32 %v1991, %v1991
    %v2248 = vmul.f32 %v1992, %v1992
    %v2249 = vmul.f32 %v1993, %v1993
    %v2250 = vmul.f32 %v1994, %v1994
    %v2251 = vmul.f32 %v1995, %v1995
    %v2252 = vmul.f32 %v1996, %v1996
    %v2253 = vmul.f32 %v1997, %v1997
    %v2254 = vmul.f32 %v1998, %v1998
    %v2255 = vmul.f32 %v1999, %v1999
    %v2256 = vmul.f32 %v2000, %v2000
    %v2257 = vmul.f32 %v2001, %v2001
    %v2258 = vmul.f32 %v2002, %v2002
    %v2259 = vmul.f32 %v2003, %v2003
    %v2260 = vmul.f32 %v2004, %v2004
    %v2261 = vmul.f32 %v2005, %v2005
    %v2262 = vmul.f32 %v2006, %v2006
    %v2263 = vmul.f32 %v2007, %v2007
    %v2264 = vmul.f32 %v2008, %v2008
    %v2265 = vmul.f32 %v2009, %v2009
    %v2266 = vmul.f32 %v2010, %v2010
    %v2267 = vmul.f32 %v2011, %v2011
    %v2268 = vmul.f32 %v2012, %v2012
    %v2269 = vmul.f32 %v2013, %v2013
    %v2270 = vmul.f32 %v2014, %v2014
    %v2271 = vmul.f32 %v2015, %v2015
    %v2272 = vmul.f32 %v2016, %v2016
    %v2273 = vmul.f32 %v2017, %v2017
    %v2274 = vmul.f32 %v2018, %v2018
    %v2275 = vmul.f32 %v2019, %v2019
    %v2276 = vmul.f32 %v2020, %v2020
    %v2277 = vmul.f32 %v2021, %v2021
    %v2278 = vmul.f32 %v2022, %v2022
    %v2279 = vmul.f32 %v2023, %v2023
    %v2280 = vmul.f32 %v2024, %v2024
    %v2281 = vmul.f32 %v2025, %v2025
    %v2282 = vmul.f32 %v2026, %v2026
    %v2283 = vmul.f32 %v2027, %v2027
    %v2284 = vmul.f32 %v2028, %v2028
    %v2285 = vmul.f32 %v2029, %v2029
    %v2286 = vmul.f32 %v2030, %v2030
    %v2287 = vmul.f32 %v2031, %v2031
    %v2288 = vmul.f32 %v2032, %v2032
    %v2289 = vmul.f32 %v2033, %v2033
    %v2290 = vmul.f32 %v2034, %v2034
    %v2291 = vmul.f32 %v2035, %v2035
    %v2292 = vmul.f32 %v2036, %v2036
    %v2293 = vmul.f32 %v2037, %v2037
    %v2294 = vmul.f32 %v2038, %v2038
    %v2295 = vmul.f32 %v2039, %v2039
    %v2296 = vmul.f32 %v2040, %v2040
    %v2297 = vmul.f32 %v2041, %v2041
    %v2298 = vmul.f32 %v2042, %v2042
    %v2299 = vmul.f32 %v2043, %v2043
    %v2300 = vmul.f32 %v2044, %v2044
    %v2301 = vmul.f32 %v2045, %v2045
    %v2302 = vmul.f32 %v2046, %v2046
    %v2303 = vmul.f32 %v2047, %v2047
    %v2304 = vmul.f32 %v2048, %v2048
    %v2305 = vmul.f32 %v2049, %v2049
    %v2306 = vmul.f32 %v2050, %v2050
    %v2307 = vmul.f32 %v2051, %v2051
    %v2308 = vmul.f32 %v2052, %v2052
    %v2309 = vmul.f32 %v2053, %v2053
    %v2310 = vmul.f32 %v2054, %v2054
    %v2311 = vmul.f32 %v2055, %v2055
    %v2312 = vmul.f32 %v2056, %v2056
    %v2313 = vmul.f32 %v2057, %v2057
    %v2314 = vmul.f32 %v2058, %v2058
    %v2315 = vmul.f32 %v2059, %v2059
    %v2316 = vmul.f32 %v2060, %v2060
    %v2317 = vmul.f32 %v2061, %v2061
    %v2318 = vmul.f32 %v2062, %v2062
    %v2319 = vmul.f32 %v2063, %v2063
    %v2320 = vsub.f32 0.0, %v2064
    %v2321 = vsub.f32 0.0, %v2065
    %v2322 = vsub.f32 0.0, %v2066
    %v2323 = vsub.f32 0.0, %v2067
    %v2324 = vsub.f32 0.0, %v2068
    %v2325 = vsub.f32 0.0, %v2069
    %v2326 = vsub.f32 0.0, %v2070
    %v2327 = vsub.f32 0.0, %v2071
    %v2328 = vsub.f32 0.0, %v2072
    %v2329 = vsub.f32 0.0, %v2073
    %v2330 = vsub.f32 0.0, %v2074
    %v2331 = vsub.f32 0.0, %v2075
    %v2332 = vsub.f32 0.0, %v2076
    %v2333 = vsub.f32 0.0, %v2077
    %v2334 = vsub.f32 0.0, %v2078
    %v2335 = vsub.f32 0.0, %v2079
    %v2336 = vsub.f32 0.0, %v2080
    %v2337 = vsub.f32 0.0, %v2081
    %v2338 = vsub.f32 0.0, %v2082
    %v2339 = vsub.f32 0.0, %v2083
    %v2340 = vsub.f32 0.0, %v2084
    %v2341 = vsub.f32 0.0, %v2085
    %v2342 = vsub.f32 0.0, %v2086
    %v2343 = vsub.f32 0.0, %v2087
    %v2344 = vsub.f32 0.0, %v2088
    %v2345 = vsub.f32 0.0, %v2089
    %v2346 = vsub.f32 0.0, %v2090
    %v2347 = vsub.f32 0.0, %v2091
    %v2348 = vsub.f32 0.0, %v2092
    %v2349 = vsub.f32 0.0, %v2093
    %v2350 = vsub.f32 0.0, %v2094
    %v2351 = vsub.f32 0.0, %v2095
    %v2352 = vsub.f32 0.0, %v2096
    %v2353 = vsub.f32 0.0, %v2097
    %v2354 = vsub.f32 0.0, %v2098
    %v2355 = vsub.f32 0.0, %v2099
    %v2356 = vsub.f32 0.0, %v2100
    %v2357 = vsub.f32 0.0, %v2101
    %v2358 = vsub.f32 0.0, %v2102
    %v2359 = vsub.f32 0.0, %v2103
    %v2360 = vsub.f32 0.0, %v2104
    %v2361 = vsub.f32 0.0, %v2105
    %v2362 = vsub.f32 0.0, %v2106
    %v2363 = vsub.f32 0.0, %v2107
    %v2364 = vsub.f32 0.0, %v2108
    %v2365 = vsub.f32 0.0, %v2109
    %v2366 = vsub.f32 0.0, %v2110
    %v2367 = vsub.f32 0.0, %v2111
    %v2368 = vsub.f32 0.0, %v2112
    %v2369 = vsub.f32 0.0, %v2113
    %v2370 = vsub.f32 0.0, %v2114
    %v2371 = vsub.f32 0.0, %v2115
    %v2372 = vsub.f32 0.0, %v2116
    %v2373 = vsub.f32 0.0, %v2117
    %v2374 = vsub.f32 0.0, %v2118
    %v2375 = vsub.f32 0.0, %v2119
    %v2376 = vsub.f32 0.0, %v2120
    %v2377 = vsub.f32 0.0, %v2121
    %v2378 = vsub.f32 0.0, %v2122
    %v2379 = vsub.f32 0.0, %v2123
    %v2380 = vsub.f32 0.0, %v2124
    %v2381 = vsub.f32 0.0, %v2125
    %v2382 = vsub.f32 0.0, %v2126
    %v2383 = vsub.f32 0.0, %v2127
    %v2384 = vsub.f32 0.0, %v2128
    %v2385 = vsub.f32 0.0, %v2129
    %v2386 = vsub.f32 0.0, %v2130
    %v2387 = vsub.f32 0.0, %v2131
    %v2388 = vsub.f32 0.0, %v2132
    %v2389 = vsub.f32 0.0, %v2133
    %v2390 = vsub.f32 0.0, %v2134
    %v2391 = vsub.f32 0.0, %v2135
    %v2392 = vsub.f32 0.0, %v2136
    %v2393 = vsub.f32 0.0, %v2137
    %v2394 = vsub.f32 0.0, %v2138
    %v2395 = vsub.f32 0.0, %v2139
    %v2396 = vsub.f32 0.0, %v2140
    %v2397 = vsub.f32 0.0, %v2141
    %v2398 = vsub.f32 0.0, %v2142
    %v2399 = vsub.f32 0.0, %v2143
    %v2400 = vsub.f32 0.0, %v2144
    %v2401 = vsub.f32 0.0, %v2145
    %v2402 = vsub.f32 0.0, %v2146
    %v2403 = vsub.f32 0.0, %v2147
    %v2404 = vsub.f32 0.0, %v2148
    %v2405 = vsub.f32 0.0, %v2149
    %v2406 = vsub.f32 0.0, %v2150
    %v2407 = vsub.f32 0.0, %v2151
    %v2408 = vsub.f32 0.0, %v2152
    %v2409 = vsub.f32 0.0, %v2153
    %v2410 = vsub.f32 0.0, %v2154
    %v2411 = vsub.f32 0.0, %v2155
    %v2412 = vsub.f32 0.0, %v2156
    %v2413 = vsub.f32 0.0, %v2157
    %v2414 = vsub.f32 0.0, %v2158
    %v2415 = vsub.f32 0.0, %v2159
    %v2416 = vsub.f32 0.0, %v2160
    %v2417 = vsub.f32 0.0, %v2161
    %v2418 = vsub.f32 0.0, %v2162
    %v2419 = vsub.f32 0.0, %v2163
    %v2420 = vsub.f32 0.0, %v2164
    %v2421 = vsub.f32 0.0, %v2165
    %v2422 = vsub.f32 0.0, %v2166
    %v2423 = vsub.f32 0.0, %v2167
    %v2424 = vsub.f32 0.0, %v2168
    %v2425 = vsub.f32 0.0, %v2169
    %v2426 = vsub.f32 0.0, %v2170
    %v2427 = vsub.f32 0.0, %v2171
    %v2428 = vsub.f32 0.0, %v2172
    %v2429 = vsub.f32 0.0, %v2173
    %v2430 = vsub.f32 0.0, %v2174
    %v2431 = vsub.f32 0.0, %v2175
    %v2432 = vsub.f32 0.0, %v2176
    %v2433 = vsub.f32 0.0, %v2177
    %v2434 = vsub.f32 0.0, %v2178
    %v2435 = vsub.f32 0.0, %v2179
    %v2436 = vsub.f32 0.0, %v2180
    %v2437 = vsub.f32 0.0, %v2181
    %v2438 = vsub.f32 0.0, %v2182
    %v2439 = vsub.f32 0.0, %v2183
    %v2440 = vsub.f32 0.0, %v2184
    %v2441 = vsub.f32 0.0, %v2185
    %v2442 = vsub.f32 0.0, %v2186
    %v2443 = vsub.f32 0.0, %v2187
    %v2444 = vsub.f32 0.0, %v2188
    %v2445 = vsub.f32 0.0, %v2189
    %v2446 = vsub.f32 0.0, %v2190
    %v2447 = vsub.f32 0.0, %v2191
    %v2448 = vsub.f32 0.0, %v2192
    %v2449 = vsub.f32 0.0, %v2193
    %v2450 = vsub.f32 0.0, %v2194
    %v2451 = vsub.f32 0.0, %v2195
    %v2452 = vsub.f32 0.0, %v2196
    %v2453 = vsub.f32 0.0, %v2197
    %v2454 = vsub.f32 0.0, %v2198
    %v2455 = vsub.f32 0.0, %v2199
    %v2456 = vsub.f32 0.0, %v2200
    %v2457 = vsub.f32 0.0, %v2201
    %v2458 = vsub.f32 0.0, %v2202
    %v2459 = vsub.f32 0.0, %v2203
    %v2460 = vsub.f32 0.0, %v2204
    %v2461 = vsub.f32 0.0, %v2205
    %v2462 = vsub.f32 0.0, %v2206
    %v2463 = vsub.f32 0.0, %v2207
    %v2464 = vsub.f32 0.0, %v2208
    %v2465 = vsub.f32 0.0, %v2209
    %v2466 = vsub.f32 0.0, %v2210
    %v2467 = vsub.f32 0.0, %v2211
    %v2468 = vsub.f32 0.0, %v2212
    %v2469 = vsub.f32 0.0, %v2213
    %v2470 = vsub.f32 0.0, %v2214
    %v2471 = vsub.f32 0.0, %v2215
    %v2472 = vsub.f32 0.0, %v2216
    %v2473 = vsub.f32 0.0, %v2217
    %v2474 = vsub.f32 0.0, %v2218
    %v2475 = vsub.f32 0.0, %v2219
    %v2476 = vsub.f32 0.0, %v2220
    %v2477 = vsub.f32 0.0, %v2221
    %v2478 = vsub.f32 0.0, %v2222
    %v2479 = vsub.f32 0.0, %v2223
    %v2480 = vsub.f32 0.0, %v2224
    %v2481 = vsub.f32 0.0, %v2225
    %v2482 = vsub.f32 0.0, %v2226
    %v2483 = vsub.f32 0.0, %v2227
    %v2484 = vsub.f32 0.0, %v2228
    %v2485 = vsub.f32 0.0, %v2229
    %v2486 = vsub.f32 0.0, %v2230
    %v2487 = vsub.f32 0.0, %v2231
    %v2488 = vsub.f32 0.0, %v2232
    %v2489 = vsub.f32 0.0, %v2233
    %v2490 = vsub.f32 0.0, %v2234
    %v2491 = vsub.f32 0.0, %v2235
    %v2492 = vsub.f32 0.0, %v2236
    %v2493 = vsub.f32 0.0, %v2237
    %v2494 = vsub.f32 0.0, %v2238
    %v2495 = vsub.f32 0.0, %v2239
    %v2496 = vsub.f32 0.0, %v2240
    %v2497 = vsub.f32 0.0, %v2241
    %v2498 = vsub.f32 0.0, %v2242
    %v2499 = vsub.f32 0.0, %v2243
    %v2500 = vsub.f32 0.0, %v2244
    %v2501 = vsub.f32 0.0, %v2245
    %v2502 = vsub.f32 0.0, %v2246
    %v2503 = vsub.f32 0.0, %v2247
    %v2504 = vsub.f32 0.0, %v2248
    %v2505 = vsub.f32 0.0, %v2249
    %v2506 = vsub.f32 0.0, %v2250
    %v2507 = vsub.f32 0.0, %v2251
    %v2508 = vsub.f32 0.0, %v2252
    %v2509 = vsub.f32 0.0, %v2253
    %v2510 = vsub.f32 0.0, %v2254
    %v2511 = vsub.f32 0.0, %v2255
    %v2512 = vsub.f32 0.0, %v2256
    %v2513 = vsub.f32 0.0, %v2257
    %v2514 = vsub.f32 0.0, %v2258
    %v2515 = vsub.f32 0.0, %v2259
    %v2516 = vsub.f32 0.0, %v2260
    %v2517 = vsub.f32 0.0, %v2261
    %v2518 = vsub.f32 0.0, %v2262
    %v2519 = vsub.f32 0.0, %v2263
    %v2520 = vsub.f32 0.0, %v2264
    %v2521 = vsub.f32 0.0, %v2265
    %v2522 = vsub.f32 0.0, %v2266
    %v2523 = vsub.f32 0.0, %v2267
    %v2524 = vsub.f32 0.0, %v2268
    %v2525 = vsub.f32 0.0, %v2269
    %v2526 = vsub.f32 0.0, %v2270
    %v2527 = vsub.f32 0.0, %v2271
    %v2528 = vsub.f32 0.0, %v2272
    %v2529 = vsub.f32 0.0, %v2273
    %v2530 = vsub.f32 0.0, %v2274
    %v2531 = vsub.f32 0.0, %v2275
    %v2532 = vsub.f32 0.0, %v2276
    %v2533 = vsub.f32 0.0, %v2277
    %v2534 = vsub.f32 0.0, %v2278
    %v2535 = vsub.f32 0.0, %v2279
    %v2536 = vsub.f32 0.0, %v2280
    %v2537 = vsub.f32 0.0, %v2281
    %v2538 = vsub.f32 0.0, %v2282
    %v2539 = vsub.f32 0.0, %v2283
    %v2540 = vsub.f32 0.0, %v2284
    %v2541 = vsub.f32 0.0, %v2285
    %v2542 = vsub.f32 0.0, %v2286
    %v2543 = vsub.f32 0.0, %v2287
    %v2544 = vsub.f32 0.0, %v2288
    %v2545 = vsub.f32 0.0, %v2289
    %v2546 = vsub.f32 0.0, %v2290
    %v2547 = vsub.f32 0.0, %v2291
    %v2548 = vsub.f32 0.0, %v2292
    %v2549 = vsub.f32 0.0, %v2293
    %v2550 = vsub.f32 0.0, %v2294
    %v2551 = vsub.f32 0.0, %v2295
    %v2552 = vsub.f32 0.0, %v2296
    %v2553 = vsub.f32 0.0, %v2297
    %v2554 = vsub.f32 0.0, %v2298
    %v2555 = vsub.f32 0.0, %v2299
    %v2556 = vsub.f32 0.0, %v2300
    %v2557 = vsub.f32 0.0, %v2301
    %v2558 = vsub.f32 0.0, %v2302
    %v2559 = vsub.f32 0.0, %v2303
    %v2560 = vsub.f32 0.0, %v2304
    %v2561 = vsub.f32 0.0, %v2305
    %v2562 = vsub.f32 0.0, %v2306
    %v2563 = vsub.f32 0.0, %v2307
    %v2564 = vsub.f32 0.0, %v2308
    %v2565 = vsub.f32 0.0, %v2309
    %v2566 = vsub.f32 0.0, %v2310
    %v2567 = vsub.f32 0.0, %v2311
    %v2568 = vsub.f32 0.0, %v2312
    %v2569 = vsub.f32 0.0, %v2313
    %v2570 = vsub.f32 0.0, %v2314
    %v2571 = vsub.f32 0.0, %v2315
    %v2572 = vsub.f32 0.0, %v2316
    %v2573 = vsub.f32 0.0, %v2317
    %v2574 = vsub.f32 0.0, %v2318
    %v2575 = vsub.f32 0.0, %v2319
    %v2576 = vmul.f32 %v2320, 1.442695
    %v2577 = vpow.pop %v2576
    %v2578 = vmul.f32 %v2321, 1.442695
    %v2579 = vpow.pop %v2578
    %v2580 = vmul.f32 %v2322, 1.442695
    %v2581 = vpow.pop %v2580
    %v2582 = vmul.f32 %v2323, 1.442695
    %v2583 = vpow.pop %v2582
    %v2584 = vmul.f32 %v2324, 1.442695
    %v2585 = vpow.pop %v2584
    %v2586 = vmul.f32 %v2325, 1.442695
    %v2587 = vpow.pop %v2586
    %v2588 = vmul.f32 %v2326, 1.442695
    %v2589 = vpow.pop %v2588
    %v2590 = vmul.f32 %v2327, 1.442695
    %v2591 = vpow.pop %v2590
    %v2592 = vmul.f32 %v2328, 1.442695
    %v2593 = vpow.pop %v2592
    %v2594 = vmul.f32 %v2329, 1.442695
    %v2595 = vpow.pop %v2594
    %v2596 = vmul.f32 %v2330, 1.442695
    %v2597 = vpow.pop %v2596
    %v2598 = vmul.f32 %v2331, 1.442695
    %v2599 = vpow.pop %v2598
    %v2600 = vmul.f32 %v2332, 1.442695
    %v2601 = vpow.pop %v2600
    %v2602 = vmul.f32 %v2333, 1.442695
    %v2603 = vpow.pop %v2602
    %v2604 = vmul.f32 %v2334, 1.442695
    %v2605 = vpow.pop %v2604
    %v2606 = vmul.f32 %v2335, 1.442695
    %v2607 = vpow.pop %v2606
    %v2608 = vmul.f32 %v2336, 1.442695
    %v2609 = vpow.pop %v2608
    %v2610 = vmul.f32 %v2337, 1.442695
    %v2611 = vpow.pop %v2610
    %v2612 = vmul.f32 %v2338, 1.442695
    %v2613 = vpow.pop %v2612
    %v2614 = vmul.f32 %v2339, 1.442695
    %v2615 = vpow.pop %v2614
    %v2616 = vmul.f32 %v2340, 1.442695
    %v2617 = vpow.pop %v2616
    %v2618 = vmul.f32 %v2341, 1.442695
    %v2619 = vpow.pop %v2618
    %v2620 = vmul.f32 %v2342, 1.442695
    %v2621 = vpow.pop %v2620
    %v2622 = vmul.f32 %v2343, 1.442695
    %v2623 = vpow.pop %v2622
    %v2624 = vmul.f32 %v2344, 1.442695
    %v2625 = vpow.pop %v2624
    %v2626 = vmul.f32 %v2345, 1.442695
    %v2627 = vpow.pop %v2626
    %v2628 = vmul.f32 %v2346, 1.442695
    %v2629 = vpow.pop %v2628
    %v2630 = vmul.f32 %v2347, 1.442695
    %v2631 = vpow.pop %v2630
    %v2632 = vmul.f32 %v2348, 1.442695
    %v2633 = vpow.pop %v2632
    %v2634 = vmul.f32 %v2349, 1.442695
    %v2635 = vpow.pop %v2634
    %v2636 = vmul.f32 %v2350, 1.442695
    %v2637 = vpow.pop %v2636
    %v2638 = vmul.f32 %v2351, 1.442695
    %v2639 = vpow.pop %v2638
    %v2640 = vmul.f32 %v2352, 1.442695
    %v2641 = vpow.pop %v2640
    %v2642 = vmul.f32 %v2353, 1.442695
    %v2643 = vpow.pop %v2642
    %v2644 = vmul.f32 %v2354, 1.442695
    %v2645 = vpow.pop %v2644
    %v2646 = vmul.f32 %v2355, 1.442695
    %v2647 = vpow.pop %v2646
    %v2648 = vmul.f32 %v2356, 1.442695
    %v2649 = vpow.pop %v2648
    %v2650 = vmul.f32 %v2357, 1.442695
    %v2651 = vpow.pop %v2650
    %v2652 = vmul.f32 %v2358, 1.442695
    %v2653 = vpow.pop %v2652
    %v2654 = vmul.f32 %v2359, 1.442695
    %v2655 = vpow.pop %v2654
    %v2656 = vmul.f32 %v2360, 1.442695
    %v2657 = vpow.pop %v2656
    %v2658 = vmul.f32 %v2361, 1.442695
    %v2659 = vpow.pop %v2658
    %v2660 = vmul.f32 %v2362, 1.442695
    %v2661 = vpow.pop %v2660
    %v2662 = vmul.f32 %v2363, 1.442695
    %v2663 = vpow.pop %v2662
    %v2664 = vmul.f32 %v2364, 1.442695
    %v2665 = vpow.pop %v2664
    %v2666 = vmul.f32 %v2365, 1.442695
    %v2667 = vpow.pop %v2666
    %v2668 = vmul.f32 %v2366, 1.442695
    %v2669 = vpow.pop %v2668
    %v2670 = vmul.f32 %v2367, 1.442695
    %v2671 = vpow.pop %v2670
    %v2672 = vmul.f32 %v2368, 1.442695
    %v2673 = vpow.pop %v2672
    %v2674 = vmul.f32 %v2369, 1.442695
    %v2675 = vpow.pop %v2674
    %v2676 = vmul.f32 %v2370, 1.442695
    %v2677 = vpow.pop %v2676
    %v2678 = vmul.f32 %v2371, 1.442695
    %v2679 = vpow.pop %v2678
    %v2680 = vmul.f32 %v2372, 1.442695
    %v2681 = vpow.pop %v2680
    %v2682 = vmul.f32 %v2373, 1.442695
    %v2683 = vpow.pop %v2682
    %v2684 = vmul.f32 %v2374, 1.442695
    %v2685 = vpow.pop %v2684
    %v2686 = vmul.f32 %v2375, 1.442695
    %v2687 = vpow.pop %v2686
    %v2688 = vmul.f32 %v2376, 1.442695
    %v2689 = vpow.pop %v2688
    %v2690 = vmul.f32 %v2377, 1.442695
    %v2691 = vpow.pop %v2690
    %v2692 = vmul.f32 %v2378, 1.442695
    %v2693 = vpow.pop %v2692
    %v2694 = vmul.f32 %v2379, 1.442695
    %v2695 = vpow.pop %v2694
    %v2696 = vmul.f32 %v2380, 1.442695
    %v2697 = vpow.pop %v2696
    %v2698 = vmul.f32 %v2381, 1.442695
    %v2699 = vpow.pop %v2698
    %v2700 = vmul.f32 %v2382, 1.442695
    %v2701 = vpow.pop %v2700
    %v2702 = vmul.f32 %v2383, 1.442695
    %v2703 = vpow.pop %v2702
    %v2704 = vmul.f32 %v2384, 1.442695
    %v2705 = vpow.pop %v2704
    %v2706 = vmul.f32 %v2385, 1.442695
    %v2707 = vpow.pop %v2706
    %v2708 = vmul.f32 %v2386, 1.442695
    %v2709 = vpow.pop %v2708
    %v2710 = vmul.f32 %v2387, 1.442695
    %v2711 = vpow.pop %v2710
    %v2712 = vmul.f32 %v2388, 1.442695
    %v2713 = vpow.pop %v2712
    %v2714 = vmul.f32 %v2389, 1.442695
    %v2715 = vpow.pop %v2714
    %v2716 = vmul.f32 %v2390, 1.442695
    %v2717 = vpow.pop %v2716
    %v2718 = vmul.f32 %v2391, 1.442695
    %v2719 = vpow.pop %v2718
    %v2720 = vmul.f32 %v2392, 1.442695
    %v2721 = vpow.pop %v2720
    %v2722 = vmul.f32 %v2393, 1.442695
    %v2723 = vpow.pop %v2722
    %v2724 = vmul.f32 %v2394, 1.442695
    %v2725 = vpow.pop %v2724
    %v2726 = vmul.f32 %v2395, 1.442695
    %v2727 = vpow.pop %v2726
    %v2728 = vmul.f32 %v2396, 1.442695
    %v2729 = vpow.pop %v2728
    %v2730 = vmul.f32 %v2397, 1.442695
    %v2731 = vpow.pop %v2730
    %v2732 = vmul.f32 %v2398, 1.442695
    %v2733 = vpow.pop %v2732
    %v2734 = vmul.f32 %v2399, 1.442695
    %v2735 = vpow.pop %v2734
    %v2736 = vmul.f32 %v2400, 1.442695
    %v2737 = vpow.pop %v2736
    %v2738 = vmul.f32 %v2401, 1.442695
    %v2739 = vpow.pop %v2738
    %v2740 = vmul.f32 %v2402, 1.442695
    %v2741 = vpow.pop %v2740
    %v2742 = vmul.f32 %v2403, 1.442695
    %v2743 = vpow.pop %v2742
    %v2744 = vmul.f32 %v2404, 1.442695
    %v2745 = vpow.pop %v2744
    %v2746 = vmul.f32 %v2405, 1.442695
    %v2747 = vpow.pop %v2746
    %v2748 = vmul.f32 %v2406, 1.442695
    %v2749 = vpow.pop %v2748
    %v2750 = vmul.f32 %v2407, 1.442695
    %v2751 = vpow.pop %v2750
    %v2752 = vmul.f32 %v2408, 1.442695
    %v2753 = vpow.pop %v2752
    %v2754 = vmul.f32 %v2409, 1.442695
    %v2755 = vpow.pop %v2754
    %v2756 = vmul.f32 %v2410, 1.442695
    %v2757 = vpow.pop %v2756
    %v2758 = vmul.f32 %v2411, 1.442695
    %v2759 = vpow.pop %v2758
    %v2760 = vmul.f32 %v2412, 1.442695
    %v2761 = vpow.pop %v2760
    %v2762 = vmul.f32 %v2413, 1.442695
    %v2763 = vpow.pop %v2762
    %v2764 = vmul.f32 %v2414, 1.442695
    %v2765 = vpow.pop %v2764
    %v2766 = vmul.f32 %v2415, 1.442695
    %v2767 = vpow.pop %v2766
    %v2768 = vmul.f32 %v2416, 1.442695
    %v2769 = vpow.pop %v2768
    %v2770 = vmul.f32 %v2417, 1.442695
    %v2771 = vpow.pop %v2770
    %v2772 = vmul.f32 %v2418, 1.442695
    %v2773 = vpow.pop %v2772
    %v2774 = vmul.f32 %v2419, 1.442695
    %v2775 = vpow.pop %v2774
    %v2776 = vmul.f32 %v2420, 1.442695
    %v2777 = vpow.pop %v2776
    %v2778 = vmul.f32 %v2421, 1.442695
    %v2779 = vpow.pop %v2778
    %v2780 = vmul.f32 %v2422, 1.442695
    %v2781 = vpow.pop %v2780
    %v2782 = vmul.f32 %v2423, 1.442695
    %v2783 = vpow.pop %v2782
    %v2784 = vmul.f32 %v2424, 1.442695
    %v2785 = vpow.pop %v2784
    %v2786 = vmul.f32 %v2425, 1.442695
    %v2787 = vpow.pop %v2786
    %v2788 = vmul.f32 %v2426, 1.442695
    %v2789 = vpow.pop %v2788
    %v2790 = vmul.f32 %v2427, 1.442695
    %v2791 = vpow.pop %v2790
    %v2792 = vmul.f32 %v2428, 1.442695
    %v2793 = vpow.pop %v2792
    %v2794 = vmul.f32 %v2429, 1.442695
    %v2795 = vpow.pop %v2794
    %v2796 = vmul.f32 %v2430, 1.442695
    %v2797 = vpow.pop %v2796
    %v2798 = vmul.f32 %v2431, 1.442695
    %v2799 = vpow.pop %v2798
    %v2800 = vmul.f32 %v2432, 1.442695
    %v2801 = vpow.pop %v2800
    %v2802 = vmul.f32 %v2433, 1.442695
    %v2803 = vpow.pop %v2802
    %v2804 = vmul.f32 %v2434, 1.442695
    %v2805 = vpow.pop %v2804
    %v2806 = vmul.f32 %v2435, 1.442695
    %v2807 = vpow.pop %v2806
    %v2808 = vmul.f32 %v2436, 1.442695
    %v2809 = vpow.pop %v2808
    %v2810 = vmul.f32 %v2437, 1.442695
    %v2811 = vpow.pop %v2810
    %v2812 = vmul.f32 %v2438, 1.442695
    %v2813 = vpow.pop %v2812
    %v2814 = vmul.f32 %v2439, 1.442695
    %v2815 = vpow.pop %v2814
    %v2816 = vmul.f32 %v2440, 1.442695
    %v2817 = vpow.pop %v2816
    %v2818 = vmul.f32 %v2441, 1.442695
    %v2819 = vpow.pop %v2818
    %v2820 = vmul.f32 %v2442, 1.442695
    %v2821 = vpow.pop %v2820
    %v2822 = vmul.f32 %v2443, 1.442695
    %v2823 = vpow.pop %v2822
    %v2824 = vmul.f32 %v2444, 1.442695
    %v2825 = vpow.pop %v2824
    %v2826 = vmul.f32 %v2445, 1.442695
    %v2827 = vpow.pop %v2826
    %v2828 = vmul.f32 %v2446, 1.442695
    %v2829 = vpow.pop %v2828
    %v2830 = vmul.f32 %v2447, 1.442695
    %v2831 = vpow.pop %v2830
    %v2832 = vmul.f32 %v2448, 1.442695
    %v2833 = vpow.pop %v2832
    %v2834 = vmul.f32 %v2449, 1.442695
    %v2835 = vpow.pop %v2834
    %v2836 = vmul.f32 %v2450, 1.442695
    %v2837 = vpow.pop %v2836
    %v2838 = vmul.f32 %v2451, 1.442695
    %v2839 = vpow.pop %v2838
    %v2840 = vmul.f32 %v2452, 1.442695
    %v2841 = vpow.pop %v2840
    %v2842 = vmul.f32 %v2453, 1.442695
    %v2843 = vpow.pop %v2842
    %v2844 = vmul.f32 %v2454, 1.442695
    %v2845 = vpow.pop %v2844
    %v2846 = vmul.f32 %v2455, 1.442695
    %v2847 = vpow.pop %v2846
    %v2848 = vmul.f32 %v2456, 1.442695
    %v2849 = vpow.pop %v2848
    %v2850 = vmul.f32 %v2457, 1.442695
    %v2851 = vpow.pop %v2850
    %v2852 = vmul.f32 %v2458, 1.442695
    %v2853 = vpow.pop %v2852
    %v2854 = vmul.f32 %v2459, 1.442695
    %v2855 = vpow.pop %v2854
    %v2856 = vmul.f32 %v2460, 1.442695
    %v2857 = vpow.pop %v2856
    %v2858 = vmul.f32 %v2461, 1.442695
    %v2859 = vpow.pop %v2858
    %v2860 = vmul.f32 %v2462, 1.442695
    %v2861 = vpow.pop %v2860
    %v2862 = vmul.f32 %v2463, 1.442695
    %v2863 = vpow.pop %v2862
    %v2864 = vmul.f32 %v2464, 1.442695
    %v2865 = vpow.pop %v2864
    %v2866 = vmul.f32 %v2465, 1.442695
    %v2867 = vpow.pop %v2866
    %v2868 = vmul.f32 %v2466, 1.442695
    %v2869 = vpow.pop %v2868
    %v2870 = vmul.f32 %v2467, 1.442695
    %v2871 = vpow.pop %v2870
    %v2872 = vmul.f32 %v2468, 1.442695
    %v2873 = vpow.pop %v2872
    %v2874 = vmul.f32 %v2469, 1.442695
    %v2875 = vpow.pop %v2874
    %v2876 = vmul.f32 %v2470, 1.442695
    %v2877 = vpow.pop %v2876
    %v2878 = vmul.f32 %v2471, 1.442695
    %v2879 = vpow.pop %v2878
    %v2880 = vmul.f32 %v2472, 1.442695
    %v2881 = vpow.pop %v2880
    %v2882 = vmul.f32 %v2473, 1.442695
    %v2883 = vpow.pop %v2882
    %v2884 = vmul.f32 %v2474, 1.442695
    %v2885 = vpow.pop %v2884
    %v2886 = vmul.f32 %v2475, 1.442695
    %v2887 = vpow.pop %v2886
    %v2888 = vmul.f32 %v2476, 1.442695
    %v2889 = vpow.pop %v2888
    %v2890 = vmul.f32 %v2477, 1.442695
    %v2891 = vpow.pop %v2890
    %v2892 = vmul.f32 %v2478, 1.442695
    %v2893 = vpow.pop %v2892
    %v2894 = vmul.f32 %v2479, 1.442695
    %v2895 = vpow.pop %v2894
    %v2896 = vmul.f32 %v2480, 1.442695
    %v2897 = vpow.pop %v2896
    %v2898 = vmul.f32 %v2481, 1.442695
    %v2899 = vpow.pop %v2898
    %v2900 = vmul.f32 %v2482, 1.442695
    %v2901 = vpow.pop %v2900
    %v2902 = vmul.f32 %v2483, 1.442695
    %v2903 = vpow.pop %v2902
    %v2904 = vmul.f32 %v2484, 1.442695
    %v2905 = vpow.pop %v2904
    %v2906 = vmul.f32 %v2485, 1.442695
    %v2907 = vpow.pop %v2906
    %v2908 = vmul.f32 %v2486, 1.442695
    %v2909 = vpow.pop %v2908
    %v2910 = vmul.f32 %v2487, 1.442695
    %v2911 = vpow.pop %v2910
    %v2912 = vmul.f32 %v2488, 1.442695
    %v2913 = vpow.pop %v2912
    %v2914 = vmul.f32 %v2489, 1.442695
    %v2915 = vpow.pop %v2914
    %v2916 = vmul.f32 %v2490, 1.442695
    %v2917 = vpow.pop %v2916
    %v2918 = vmul.f32 %v2491, 1.442695
    %v2919 = vpow.pop %v2918
    %v2920 = vmul.f32 %v2492, 1.442695
    %v2921 = vpow.pop %v2920
    %v2922 = vmul.f32 %v2493, 1.442695
    %v2923 = vpow.pop %v2922
    %v2924 = vmul.f32 %v2494, 1.442695
    %v2925 = vpow.pop %v2924
    %v2926 = vmul.f32 %v2495, 1.442695
    %v2927 = vpow.pop %v2926
    %v2928 = vmul.f32 %v2496, 1.442695
    %v2929 = vpow.pop %v2928
    %v2930 = vmul.f32 %v2497, 1.442695
    %v2931 = vpow.pop %v2930
    %v2932 = vmul.f32 %v2498, 1.442695
    %v2933 = vpow.pop %v2932
    %v2934 = vmul.f32 %v2499, 1.442695
    %v2935 = vpow.pop %v2934
    %v2936 = vmul.f32 %v2500, 1.442695
    %v2937 = vpow.pop %v2936
    %v2938 = vmul.f32 %v2501, 1.442695
    %v2939 = vpow.pop %v2938
    %v2940 = vmul.f32 %v2502, 1.442695
    %v2941 = vpow.pop %v2940
    %v2942 = vmul.f32 %v2503, 1.442695
    %v2943 = vpow.pop %v2942
    %v2944 = vmul.f32 %v2504, 1.442695
    %v2945 = vpow.pop %v2944
    %v2946 = vmul.f32 %v2505, 1.442695
    %v2947 = vpow.pop %v2946
    %v2948 = vmul.f32 %v2506, 1.442695
    %v2949 = vpow.pop %v2948
    %v2950 = vmul.f32 %v2507, 1.442695
    %v2951 = vpow.pop %v2950
    %v2952 = vmul.f32 %v2508, 1.442695
    %v2953 = vpow.pop %v2952
    %v2954 = vmul.f32 %v2509, 1.442695
    %v2955 = vpow.pop %v2954
    %v2956 = vmul.f32 %v2510, 1.442695
    %v2957 = vpow.pop %v2956
    %v2958 = vmul.f32 %v2511, 1.442695
    %v2959 = vpow.pop %v2958
    %v2960 = vmul.f32 %v2512, 1.442695
    %v2961 = vpow.pop %v2960
    %v2962 = vmul.f32 %v2513, 1.442695
    %v2963 = vpow.pop %v2962
    %v2964 = vmul.f32 %v2514, 1.442695
    %v2965 = vpow.pop %v2964
    %v2966 = vmul.f32 %v2515, 1.442695
    %v2967 = vpow.pop %v2966
    %v2968 = vmul.f32 %v2516, 1.442695
    %v2969 = vpow.pop %v2968
    %v2970 = vmul.f32 %v2517, 1.442695
    %v2971 = vpow.pop %v2970
    %v2972 = vmul.f32 %v2518, 1.442695
    %v2973 = vpow.pop %v2972
    %v2974 = vmul.f32 %v2519, 1.442695
    %v2975 = vpow.pop %v2974
    %v2976 = vmul.f32 %v2520, 1.442695
    %v2977 = vpow.pop %v2976
    %v2978 = vmul.f32 %v2521, 1.442695
    %v2979 = vpow.pop %v2978
    %v2980 = vmul.f32 %v2522, 1.442695
    %v2981 = vpow.pop %v2980
    %v2982 = vmul.f32 %v2523, 1.442695
    %v2983 = vpow.pop %v2982
    %v2984 = vmul.f32 %v2524, 1.442695
    %v2985 = vpow.pop %v2984
    %v2986 = vmul.f32 %v2525, 1.442695
    %v2987 = vpow.pop %v2986
    %v2988 = vmul.f32 %v2526, 1.442695
    %v2989 = vpow.pop %v2988
    %v2990 = vmul.f32 %v2527, 1.442695
    %v2991 = vpow.pop %v2990
    %v2992 = vmul.f32 %v2528, 1.442695
    %v2993 = vpow.pop %v2992
    %v2994 = vmul.f32 %v2529, 1.442695
    %v2995 = vpow.pop %v2994
    %v2996 = vmul.f32 %v2530, 1.442695
    %v2997 = vpow.pop %v2996
    %v2998 = vmul.f32 %v2531, 1.442695
    %v2999 = vpow.pop %v2998
    %v3000 = vmul.f32 %v2532, 1.442695
    %v3001 = vpow.pop %v3000
    %v3002 = vmul.f32 %v2533, 1.442695
    %v3003 = vpow.pop %v3002
    %v3004 = vmul.f32 %v2534, 1.442695
    %v3005 = vpow.pop %v3004
    %v3006 = vmul.f32 %v2535, 1.442695
    %v3007 = vpow.pop %v3006
    %v3008 = vmul.f32 %v2536, 1.442695
    %v3009 = vpow.pop %v3008
    %v3010 = vmul.f32 %v2537, 1.442695
    %v3011 = vpow.pop %v3010
    %v3012 = vmul.f32 %v2538, 1.442695
    %v3013 = vpow.pop %v3012
    %v3014 = vmul.f32 %v2539, 1.442695
    %v3015 = vpow.pop %v3014
    %v3016 = vmul.f32 %v2540, 1.442695
    %v3017 = vpow.pop %v3016
    %v3018 = vmul.f32 %v2541, 1.442695
    %v3019 = vpow.pop %v3018
    %v3020 = vmul.f32 %v2542, 1.442695
    %v3021 = vpow.pop %v3020
    %v3022 = vmul.f32 %v2543, 1.442695
    %v3023 = vpow.pop %v3022
    %v3024 = vmul.f32 %v2544, 1.442695
    %v3025 = vpow.pop %v3024
    %v3026 = vmul.f32 %v2545, 1.442695
    %v3027 = vpow.pop %v3026
    %v3028 = vmul.f32 %v2546, 1.442695
    %v3029 = vpow.pop %v3028
    %v3030 = vmul.f32 %v2547, 1.442695
    %v3031 = vpow.pop %v3030
    %v3032 = vmul.f32 %v2548, 1.442695
    %v3033 = vpow.pop %v3032
    %v3034 = vmul.f32 %v2549, 1.442695
    %v3035 = vpow.pop %v3034
    %v3036 = vmul.f32 %v2550, 1.442695
    %v3037 = vpow.pop %v3036
    %v3038 = vmul.f32 %v2551, 1.442695
    %v3039 = vpow.pop %v3038
    %v3040 = vmul.f32 %v2552, 1.442695
    %v3041 = vpow.pop %v3040
    %v3042 = vmul.f32 %v2553, 1.442695
    %v3043 = vpow.pop %v3042
    %v3044 = vmul.f32 %v2554, 1.442695
    %v3045 = vpow.pop %v3044
    %v3046 = vmul.f32 %v2555, 1.442695
    %v3047 = vpow.pop %v3046
    %v3048 = vmul.f32 %v2556, 1.442695
    %v3049 = vpow.pop %v3048
    %v3050 = vmul.f32 %v2557, 1.442695
    %v3051 = vpow.pop %v3050
    %v3052 = vmul.f32 %v2558, 1.442695
    %v3053 = vpow.pop %v3052
    %v3054 = vmul.f32 %v2559, 1.442695
    %v3055 = vpow.pop %v3054
    %v3056 = vmul.f32 %v2560, 1.442695
    %v3057 = vpow.pop %v3056
    %v3058 = vmul.f32 %v2561, 1.442695
    %v3059 = vpow.pop %v3058
    %v3060 = vmul.f32 %v2562, 1.442695
    %v3061 = vpow.pop %v3060
    %v3062 = vmul.f32 %v2563, 1.442695
    %v3063 = vpow.pop %v3062
    %v3064 = vmul.f32 %v2564, 1.442695
    %v3065 = vpow.pop %v3064
    %v3066 = vmul.f32 %v2565, 1.442695
    %v3067 = vpow.pop %v3066
    %v3068 = vmul.f32 %v2566, 1.442695
    %v3069 = vpow.pop %v3068
    %v3070 = vmul.f32 %v2567, 1.442695
    %v3071 = vpow.pop %v3070
    %v3072 = vmul.f32 %v2568, 1.442695
    %v3073 = vpow.pop %v3072
    %v3074 = vmul.f32 %v2569, 1.442695
    %v3075 = vpow.pop %v3074
    %v3076 = vmul.f32 %v2570, 1.442695
    %v3077 = vpow.pop %v3076
    %v3078 = vmul.f32 %v2571, 1.442695
    %v3079 = vpow.pop %v3078
    %v3080 = vmul.f32 %v2572, 1.442695
    %v3081 = vpow.pop %v3080
    %v3082 = vmul.f32 %v2573, 1.442695
    %v3083 = vpow.pop %v3082
    %v3084 = vmul.f32 %v2574, 1.442695
    %v3085 = vpow.pop %v3084
    %v3086 = vmul.f32 %v2575, 1.442695
    %v3087 = vpow.pop %v3086
    %3088 = vst [vmem:[#allocation2] sm:$0xff] %v2577
    %3089 = vst [vmem:[#allocation2 + $0x8] sm:$0xff] %v2579
    %3090 = vst [vmem:[#allocation2 + $0x10] sm:$0xff] %v2581
    %3091 = vst [vmem:[#allocation2 + $0x18] sm:$0xff] %v2583
    %3092 = vst [vmem:[#allocation2 + $0x20] sm:$0xff] %v2585
    %3093 = vst [vmem:[#allocation2 + $0x28] sm:$0xff] %v2587
    %3094 = vst [vmem:[#allocation2 + $0x30] sm:$0xff] %v2589
    %3095 = vst [vmem:[#allocation2 + $0x38] sm:$0xff] %v2591
    %3096 = vst [vmem:[#allocation2 + $0x40] sm:$0xff] %v2593
    %3097 = vst [vmem:[#allocation2 + $0x48] sm:$0xff] %v2595
    %3098 = vst [vmem:[#allocation2 + $0x50] sm:$0xff] %v2597
    %3099 = vst [vmem:[#allocation2 + $0x58] sm:$0xff] %v2599
    %3100 = vst [vmem:[#allocation2 + $0x60] sm:$0xff] %v2601
    %3101 = vst [vmem:[#allocation2 + $0x68] sm:$0xff] %v2603
    %3102 = vst [vmem:[#allocation2 + $0x70] sm:$0xff] %v2605
    %3103 = vst [vmem:[#allocation2 + $0x78] sm:$0xff] %v2607
    %3104 = vst [vmem:[#allocation2 + $0x80] sm:$0xff] %v2609
    %3105 = vst [vmem:[#allocation2 + $0x88] sm:$0xff] %v2611
    %3106 = vst [vmem:[#allocation2 + $0x90] sm:$0xff] %v2613
    %3107 = vst [vmem:[#allocation2 + $0x98] sm:$0xff] %v2615
    %3108 = vst [vmem:[#allocation2 + $0xa0] sm:$0xff] %v2617
    %3109 = vst [vmem:[#allocation2 + $0xa8] sm:$0xff] %v2619
    %3110 = vst [vmem:[#allocation2 + $0xb0] sm:$0xff] %v2621
    %3111 = vst [vmem:[#allocation2 + $0xb8] sm:$0xff] %v2623
    %3112 = vst [vmem:[#allocation2 + $0xc0] sm:$0xff] %v2625
    %3113 = vst [vmem:[#allocation2 + $0xc8] sm:$0xff] %v2627
    %3114 = vst [vmem:[#allocation2 + $0xd0] sm:$0xff] %v2629
    %3115 = vst [vmem:[#allocation2 + $0xd8] sm:$0xff] %v2631
    %3116 = vst [vmem:[#allocation2 + $0xe0] sm:$0xff] %v2633
    %3117 = vst [vmem:[#allocation2 + $0xe8] sm:$0xff] %v2635
    %3118 = vst [vmem:[#allocation2 + $0xf0] sm:$0xff] %v2637
    %3119 = vst [vmem:[#allocation2 + $0xf8] sm:$0xff] %v2639
    %3120 = vst [vmem:[#allocation2 + $0x100] sm:$0xff] %v2641
    %3121 = vst [vmem:[#allocation2 + $0x108] sm:$0xff] %v2643
    %3122 = vst [vmem:[#allocation2 + $0x110] sm:$0xff] %v2645
    %3123 = vst [vmem:[#allocation2 + $0x118] sm:$0xff] %v2647
    %3124 = vst [vmem:[#allocation2 + $0x120] sm:$0xff] %v2649
    %3125 = vst [vmem:[#allocation2 + $0x128] sm:$0xff] %v2651
    %3126 = vst [vmem:[#allocation2 + $0x130] sm:$0xff] %v2653
    %3127 = vst [vmem:[#allocation2 + $0x138] sm:$0xff] %v2655
    %3128 = vst [vmem:[#allocation2 + $0x140] sm:$0xff] %v2657
    %3129 = vst [vmem:[#allocation2 + $0x148] sm:$0xff] %v2659
    %3130 = vst [vmem:[#allocation2 + $0x150] sm:$0xff] %v2661
    %3131 = vst [vmem:[#allocation2 + $0x158] sm:$0xff] %v2663
    %3132 = vst [vmem:[#allocation2 + $0x160] sm:$0xff] %v2665
    %3133 = vst [vmem:[#allocation2 + $0x168] sm:$0xff] %v2667
    %3134 = vst [vmem:[#allocation2 + $0x170] sm:$0xff] %v2669
    %3135 = vst [vmem:[#allocation2 + $0x178] sm:$0xff] %v2671
    %3136 = vst [vmem:[#allocation2 + $0x180] sm:$0xff] %v2673
    %3137 = vst [vmem:[#allocation2 + $0x188] sm:$0xff] %v2675
    %3138 = vst [vmem:[#allocation2 + $0x190] sm:$0xff] %v2677
    %3139 = vst [vmem:[#allocation2 + $0x198] sm:$0xff] %v2679
    %3140 = vst [vmem:[#allocation2 + $0x1a0] sm:$0xff] %v2681
    %3141 = vst [vmem:[#allocation2 + $0x1a8] sm:$0xff] %v2683
    %3142 = vst [vmem:[#allocation2 + $0x1b0] sm:$0xff] %v2685
    %3143 = vst [vmem:[#allocation2 + $0x1b8] sm:$0xff] %v2687
    %3144 = vst [vmem:[#allocation2 + $0x1c0] sm:$0xff] %v2689
    %3145 = vst [vmem:[#allocation2 + $0x1c8] sm:$0xff] %v2691
    %3146 = vst [vmem:[#allocation2 + $0x1d0] sm:$0xff] %v2693
    %3147 = vst [vmem:[#allocation2 + $0x1d8] sm:$0xff] %v2695
    %3148 = vst [vmem:[#allocation2 + $0x1e0] sm:$0xff] %v2697
    %3149 = vst [vmem:[#allocation2 + $0x1e8] sm:$0xff] %v2699
    %3150 = vst [vmem:[#allocation2 + $0x1f0] sm:$0xff] %v2701
    %3151 = vst [vmem:[#allocation2 + $0x1f8] sm:$0xff] %v2703
    %3152 = vst [vmem:[#allocation2 + $0x200] sm:$0xff] %v2705
    %3153 = vst [vmem:[#allocation2 + $0x208] sm:$0xff] %v2707
    %3154 = vst [vmem:[#allocation2 + $0x210] sm:$0xff] %v2709
    %3155 = vst [vmem:[#allocation2 + $0x218] sm:$0xff] %v2711
    %3156 = vst [vmem:[#allocation2 + $0x220] sm:$0xff] %v2713
    %3157 = vst [vmem:[#allocation2 + $0x228] sm:$0xff] %v2715
    %3158 = vst [vmem:[#allocation2 + $0x230] sm:$0xff] %v2717
    %3159 = vst [vmem:[#allocation2 + $0x238] sm:$0xff] %v2719
    %3160 = vst [vmem:[#allocation2 + $0x240] sm:$0xff] %v2721
    %3161 = vst [vmem:[#allocation2 + $0x248] sm:$0xff] %v2723
    %3162 = vst [vmem:[#allocation2 + $0x250] sm:$0xff] %v2725
    %3163 = vst [vmem:[#allocation2 + $0x258] sm:$0xff] %v2727
    %3164 = vst [vmem:[#allocation2 + $0x260] sm:$0xff] %v2729
    %3165 = vst [vmem:[#allocation2 + $0x268] sm:$0xff] %v2731
    %3166 = vst [vmem:[#allocation2 + $0x270] sm:$0xff] %v2733
    %3167 = vst [vmem:[#allocation2 + $0x278] sm:$0xff] %v2735
    %3168 = vst [vmem:[#allocation2 + $0x280] sm:$0xff] %v2737
    %3169 = vst [vmem:[#allocation2 + $0x288] sm:$0xff] %v2739
    %3170 = vst [vmem:[#allocation2 + $0x290] sm:$0xff] %v2741
    %3171 = vst [vmem:[#allocation2 + $0x298] sm:$0xff] %v2743
    %3172 = vst [vmem:[#allocation2 + $0x2a0] sm:$0xff] %v2745
    %3173 = vst [vmem:[#allocation2 + $0x2a8] sm:$0xff] %v2747
    %3174 = vst [vmem:[#allocation2 + $0x2b0] sm:$0xff] %v2749
    %3175 = vst [vmem:[#allocation2 + $0x2b8] sm:$0xff] %v2751
    %3176 = vst [vmem:[#allocation2 + $0x2c0] sm:$0xff] %v2753
    %3177 = vst [vmem:[#allocation2 + $0x2c8] sm:$0xff] %v2755
    %3178 = vst [vmem:[#allocation2 + $0x2d0] sm:$0xff] %v2757
    %3179 = vst [vmem:[#allocation2 + $0x2d8] sm:$0xff] %v2759
    %3180 = vst [vmem:[#allocation2 + $0x2e0] sm:$0xff] %v2761
    %3181 = vst [vmem:[#allocation2 + $0x2e8] sm:$0xff] %v2763
    %3182 = vst [vmem:[#allocation2 + $0x2f0] sm:$0xff] %v2765
    %3183 = vst [vmem:[#allocation2 + $0x2f8] sm:$0xff] %v2767
    %3184 = vst [vmem:[#allocation2 + $0x300] sm:$0xff] %v2769
    %3185 = vst [vmem:[#allocation2 + $0x308] sm:$0xff] %v2771
    %3186 = vst [vmem:[#allocation2 + $0x310] sm:$0xff] %v2773
    %3187 = vst [vmem:[#allocation2 + $0x318] sm:$0xff] %v2775
    %3188 = vst [vmem:[#allocation2 + $0x320] sm:$0xff] %v2777
    %3189 = vst [vmem:[#allocation2 + $0x328] sm:$0xff] %v2779
    %3190 = vst [vmem:[#allocation2 + $0x330] sm:$0xff] %v2781
    %3191 = vst [vmem:[#allocation2 + $0x338] sm:$0xff] %v2783
    %3192 = vst [vmem:[#allocation2 + $0x340] sm:$0xff] %v2785
    %3193 = vst [vmem:[#allocation2 + $0x348] sm:$0xff] %v2787
    %3194 = vst [vmem:[#allocation2 + $0x350] sm:$0xff] %v2789
    %3195 = vst [vmem:[#allocation2 + $0x358] sm:$0xff] %v2791
    %3196 = vst [vmem:[#allocation2 + $0x360] sm:$0xff] %v2793
    %3197 = vst [vmem:[#allocation2 + $0x368] sm:$0xff] %v2795
    %3198 = vst [vmem:[#allocation2 + $0x370] sm:$0xff] %v2797
    %3199 = vst [vmem:[#allocation2 + $0x378] sm:$0xff] %v2799
    %3200 = vst [vmem:[#allocation2 + $0x380] sm:$0xff] %v2801
    %3201 = vst [vmem:[#allocation2 + $0x388] sm:$0xff] %v2803
    %3202 = vst [vmem:[#allocation2 + $0x390] sm:$0xff] %v2805
    %3203 = vst [vmem:[#allocation2 + $0x398] sm:$0xff] %v2807
    %3204 = vst [vmem:[#allocation2 + $0x3a0] sm:$0xff] %v2809
    %3205 = vst [vmem:[#allocation2 + $0x3a8] sm:$0xff] %v2811
    %3206 = vst [vmem:[#allocation2 + $0x3b0] sm:$0xff] %v2813
    %3207 = vst [vmem:[#allocation2 + $0x3b8] sm:$0xff] %v2815
    %3208 = vst [vmem:[#allocation2 + $0x3c0] sm:$0xff] %v2817
    %3209 = vst [vmem:[#allocation2 + $0x3c8] sm:$0xff] %v2819
    %3210 = vst [vmem:[#allocation2 + $0x3d0] sm:$0xff] %v2821
    %3211 = vst [vmem:[#allocation2 + $0x3d8] sm:$0xff] %v2823
    %3212 = vst [vmem:[#allocation2 + $0x3e0] sm:$0xff] %v2825
    %3213 = vst [vmem:[#allocation2 + $0x3e8] sm:$0xff] %v2827
    %3214 = vst [vmem:[#allocation2 + $0x3f0] sm:$0xff] %v2829
    %3215 = vst [vmem:[#allocation2 + $0x3f8] sm:$0xff] %v2831
    %3216 = vst [vmem:[#allocation2 + $0x400] sm:$0xff] %v2833
    %3217 = vst [vmem:[#allocation2 + $0x408] sm:$0xff] %v2835
    %3218 = vst [vmem:[#allocation2 + $0x410] sm:$0xff] %v2837
    %3219 = vst [vmem:[#allocation2 + $0x418] sm:$0xff] %v2839
    %3220 = vst [vmem:[#allocation2 + $0x420] sm:$0xff] %v2841
    %3221 = vst [vmem:[#allocation2 + $0x428] sm:$0xff] %v2843
    %3222 = vst [vmem:[#allocation2 + $0x430] sm:$0xff] %v2845
    %3223 = vst [vmem:[#allocation2 + $0x438] sm:$0xff] %v2847
    %3224 = vst [vmem:[#allocation2 + $0x440] sm:$0xff] %v2849
    %3225 = vst [vmem:[#allocation2 + $0x448] sm:$0xff] %v2851
    %3226 = vst [vmem:[#allocation2 + $0x450] sm:$0xff] %v2853
    %3227 = vst [vmem:[#allocation2 + $0x458] sm:$0xff] %v2855
    %3228 = vst [vmem:[#allocation2 + $0x460] sm:$0xff] %v2857
    %3229 = vst [vmem:[#allocation2 + $0x468] sm:$0xff] %v2859
    %3230 = vst [vmem:[#allocation2 + $0x470] sm:$0xff] %v2861
    %3231 = vst [vmem:[#allocation2 + $0x478] sm:$0xff] %v2863
    %3232 = vst [vmem:[#allocation2 + $0x480] sm:$0xff] %v2865
    %3233 = vst [vmem:[#allocation2 + $0x488] sm:$0xff] %v2867
    %3234 = vst [vmem:[#allocation2 + $0x490] sm:$0xff] %v2869
    %3235 = vst [vmem:[#allocation2 + $0x498] sm:$0xff] %v2871
    %3236 = vst [vmem:[#allocation2 + $0x4a0] sm:$0xff] %v2873
    %3237 = vst [vmem:[#allocation2 + $0x4a8] sm:$0xff] %v2875
    %3238 = vst [vmem:[#allocation2 + $0x4b0] sm:$0xff] %v2877
    %3239 = vst [vmem:[#allocation2 + $0x4b8] sm:$0xff] %v2879
    %3240 = vst [vmem:[#allocation2 + $0x4c0] sm:$0xff] %v2881
    %3241 = vst [vmem:[#allocation2 + $0x4c8] sm:$0xff] %v2883
    %3242 = vst [vmem:[#allocation2 + $0x4d0] sm:$0xff] %v2885
    %3243 = vst [vmem:[#allocation2 + $0x4d8] sm:$0xff] %v2887
    %3244 = vst [vmem:[#allocation2 + $0x4e0] sm:$0xff] %v2889
    %3245 = vst [vmem:[#allocation2 + $0x4e8] sm:$0xff] %v2891
    %3246 = vst [vmem:[#allocation2 + $0x4f0] sm:$0xff] %v2893
    %3247 = vst [vmem:[#allocation2 + $0x4f8] sm:$0xff] %v2895
    %3248 = vst [vmem:[#allocation2 + $0x500] sm:$0xff] %v2897
    %3249 = vst [vmem:[#allocation2 + $0x508] sm:$0xff] %v2899
    %3250 = vst [vmem:[#allocation2 + $0x510] sm:$0xff] %v2901
    %3251 = vst [vmem:[#allocation2 + $0x518] sm:$0xff] %v2903
    %3252 = vst [vmem:[#allocation2 + $0x520] sm:$0xff] %v2905
    %3253 = vst [vmem:[#allocation2 + $0x528] sm:$0xff] %v2907
    %3254 = vst [vmem:[#allocation2 + $0x530] sm:$0xff] %v2909
    %3255 = vst [vmem:[#allocation2 + $0x538] sm:$0xff] %v2911
    %3256 = vst [vmem:[#allocation2 + $0x540] sm:$0xff] %v2913
    %3257 = vst [vmem:[#allocation2 + $0x548] sm:$0xff] %v2915
    %3258 = vst [vmem:[#allocation2 + $0x550] sm:$0xff] %v2917
    %3259 = vst [vmem:[#allocation2 + $0x558] sm:$0xff] %v2919
    %3260 = vst [vmem:[#allocation2 + $0x560] sm:$0xff] %v2921
    %3261 = vst [vmem:[#allocation2 + $0x568] sm:$0xff] %v2923
    %3262 = vst [vmem:[#allocation2 + $0x570] sm:$0xff] %v2925
    %3263 = vst [vmem:[#allocation2 + $0x578] sm:$0xff] %v2927
    %3264 = vst [vmem:[#allocation2 + $0x580] sm:$0xff] %v2929
    %3265 = vst [vmem:[#allocation2 + $0x588] sm:$0xff] %v2931
    %3266 = vst [vmem:[#allocation2 + $0x590] sm:$0xff] %v2933
    %3267 = vst [vmem:[#allocation2 + $0x598] sm:$0xff] %v2935
    %3268 = vst [vmem:[#allocation2 + $0x5a0] sm:$0xff] %v2937
    %3269 = vst [vmem:[#allocation2 + $0x5a8] sm:$0xff] %v2939
    %3270 = vst [vmem:[#allocation2 + $0x5b0] sm:$0xff] %v2941
    %3271 = vst [vmem:[#allocation2 + $0x5b8] sm:$0xff] %v2943
    %3272 = vst [vmem:[#allocation2 + $0x5c0] sm:$0xff] %v2945
    %3273 = vst [vmem:[#allocation2 + $0x5c8] sm:$0xff] %v2947
    %3274 = vst [vmem:[#allocation2 + $0x5d0] sm:$0xff] %v2949
    %3275 = vst [vmem:[#allocation2 + $0x5d8] sm:$0xff] %v2951
    %3276 = vst [vmem:[#allocation2 + $0x5e0] sm:$0xff] %v2953
    %3277 = vst [vmem:[#allocation2 + $0x5e8] sm:$0xff] %v2955
    %3278 = vst [vmem:[#allocation2 + $0x5f0] sm:$0xff] %v2957
    %3279 = vst [vmem:[#allocation2 + $0x5f8] sm:$0xff] %v2959
    %3280 = vst [vmem:[#allocation2 + $0x600] sm:$0xff] %v2961
    %3281 = vst [vmem:[#allocation2 + $0x608] sm:$0xff] %v2963
    %3282 = vst [vmem:[#allocation2 + $0x610] sm:$0xff] %v2965
    %3283 = vst [vmem:[#allocation2 + $0x618] sm:$0xff] %v2967
    %3284 = vst [vmem:[#allocation2 + $0x620] sm:$0xff] %v2969
    %3285 = vst [vmem:[#allocation2 + $0x628] sm:$0xff] %v2971
    %3286 = vst [vmem:[#allocation2 + $0x630] sm:$0xff] %v2973
    %3287 = vst [vmem:[#allocation2 + $0x638] sm:$0xff] %v2975
    %3288 = vst [vmem:[#allocation2 + $0x640] sm:$0xff] %v2977
    %3289 = vst [vmem:[#allocation2 + $0x648] sm:$0xff] %v2979
    %3290 = vst [vmem:[#allocation2 + $0x650] sm:$0xff] %v2981
    %3291 = vst [vmem:[#allocation2 + $0x658] sm:$0xff] %v2983
    %3292 = vst [vmem:[#allocation2 + $0x660] sm:$0xff] %v2985
    %3293 = vst [vmem:[#allocation2 + $0x668] sm:$0xff] %v2987
    %3294 = vst [vmem:[#allocation2 + $0x670] sm:$0xff] %v2989
    %3295 = vst [vmem:[#allocation2 + $0x678] sm:$0xff] %v2991
    %3296 = vst [vmem:[#allocation2 + $0x680] sm:$0xff] %v2993
    %3297 = vst [vmem:[#allocation2 + $0x688] sm:$0xff] %v2995
    %3298 = vst [vmem:[#allocation2 + $0x690] sm:$0xff] %v2997
    %3299 = vst [vmem:[#allocation2 + $0x698] sm:$0xff] %v2999
    %3300 = vst [vmem:[#allocation2 + $0x6a0] sm:$0xff] %v3001
    %3301 = vst [vmem:[#allocation2 + $0x6a8] sm:$0xff] %v3003
    %3302 = vst [vmem:[#allocation2 + $0x6b0] sm:$0xff] %v3005
    %3303 = vst [vmem:[#allocation2 + $0x6b8] sm:$0xff] %v3007
    %3304 = vst [vmem:[#allocation2 + $0x6c0] sm:$0xff] %v3009
    %3305 = vst [vmem:[#allocation2 + $0x6c8] sm:$0xff] %v3011
    %3306 = vst [vmem:[#allocation2 + $0x6d0] sm:$0xff] %v3013
    %3307 = vst [vmem:[#allocation2 + $0x6d8] sm:$0xff] %v3015
    %3308 = vst [vmem:[#allocation2 + $0x6e0] sm:$0xff] %v3017
    %3309 = vst [vmem:[#allocation2 + $0x6e8] sm:$0xff] %v3019
    %3310 = vst [vmem:[#allocation2 + $0x6f0] sm:$0xff] %v3021
    %3311 = vst [vmem:[#allocation2 + $0x6f8] sm:$0xff] %v3023
    %3312 = vst [vmem:[#allocation2 + $0x700] sm:$0xff] %v3025
    %3313 = vst [vmem:[#allocation2 + $0x708] sm:$0xff] %v3027
    %3314 = vst [vmem:[#allocation2 + $0x710] sm:$0xff] %v3029
    %3315 = vst [vmem:[#allocation2 + $0x718] sm:$0xff] %v3031
    %3316 = vst [vmem:[#allocation2 + $0x720] sm:$0xff] %v3033
    %3317 = vst [vmem:[#allocation2 + $0x728] sm:$0xff] %v3035
    %3318 = vst [vmem:[#allocation2 + $0x730] sm:$0xff] %v3037
    %3319 = vst [vmem:[#allocation2 + $0x738] sm:$0xff] %v3039
    %3320 = vst [vmem:[#allocation2 + $0x740] sm:$0xff] %v3041
    %3321 = vst [vmem:[#allocation2 + $0x748] sm:$0xff] %v3043
    %3322 = vst [vmem:[#allocation2 + $0x750] sm:$0xff] %v3045
    %3323 = vst [vmem:[#allocation2 + $0x758] sm:$0xff] %v3047
    %3324 = vst [vmem:[#allocation2 + $0x760] sm:$0xff] %v3049
    %3325 = vst [vmem:[#allocation2 + $0x768] sm:$0xff] %v3051
    %3326 = vst [vmem:[#allocation2 + $0x770] sm:$0xff] %v3053
    %3327 = vst [vmem:[#allocation2 + $0x778] sm:$0xff] %v3055
    %3328 = vst [vmem:[#allocation2 + $0x780] sm:$0xff] %v3057
    %3329 = vst [vmem:[#allocation2 + $0x788] sm:$0xff] %v3059
    %3330 = vst [vmem:[#allocation2 + $0x790] sm:$0xff] %v3061
    %3331 = vst [vmem:[#allocation2 + $0x798] sm:$0xff] %v3063
    %3332 = vst [vmem:[#allocation2 + $0x7a0] sm:$0xff] %v3065
    %3333 = vst [vmem:[#allocation2 + $0x7a8] sm:$0xff] %v3067
    %3334 = vst [vmem:[#allocation2 + $0x7b0] sm:$0xff] %v3069
    %3335 = vst [vmem:[#allocation2 + $0x7b8] sm:$0xff] %v3071
    %3336 = vst [vmem:[#allocation2 + $0x7c0] sm:$0xff] %v3073
    %3337 = vst [vmem:[#allocation2 + $0x7c8] sm:$0xff] %v3075
    %3338 = vst [vmem:[#allocation2 + $0x7d0] sm:$0xff] %v3077
    %3339 = vst [vmem:[#allocation2 + $0x7d8] sm:$0xff] %v3079
    %3340 = vst [vmem:[#allocation2 + $0x7e0] sm:$0xff] %v3081
    %3341 = vst [vmem:[#allocation2 + $0x7e8] sm:$0xff] %v3083
    %3342 = vst [vmem:[#allocation2 + $0x7f0] sm:$0xff] %v3085
    %3343 = vst [vmem:[#allocation2 + $0x7f8] sm:$0xff] %v3087
    // Predicated region
    $region10: #{tpu_custom_call.1} parent=1 // pred_check
      _
    $region11: #{tpu_custom_call.1} parent=1 // pred_check_branch
      %3345 = sbr.rel (0) target = $region13
    $region12: #{tpu_custom_call.1} parent=1 // pred_region
      %3347 = vsyncadd [#allocation3], 0
      %s3348 = sshll.u32 [#allocation2], 4
      %s3349 = int_to_ptr.vmem [resolvable:$true] %s3348
      %s3350 = sshll.u32 %s2, 4
      %s3351 = int_to_ptr.hbm [resolvable:$true] %s3350
      %3356 = dma.vmem_to_hbm [thread:$0]  %s3349, 32768, %s3351, [#allocation3], 128, 128, 8
    $region13: #{tpu_custom_call.1} parent=1 // pred_fallthru
      _
    // Predicated region
    $region14: #{tpu_custom_call.1} parent=1 // pred_check
      _
    $region15: #{tpu_custom_call.1} parent=1 // pred_check_branch
      %3358 = sbr.rel (0) target = $region17
    $region16: #{tpu_custom_call.1} parent=1 // pred_region
      %3360 = dma.done [#allocation3], 32768
    $region17: #{tpu_custom_call.1} parent=1 // pred_fallthru
      _
    %3361 = vsyncpa [#allocation3], 1

</llo_original>
